<compile_context>
chip_gen: v6e
topology: v6e:2x2x1
jax: 0.10.0
libtpu: 0.0.40
codegen_flags: <defaults>
</compile_context>

<pallas_src>
import jax
import jax.numpy as jnp
from jax import lax
from jax.experimental import pallas as pl
from jax.experimental.pallas import tpu as pltpu


def _make_kernel(H, W):
    hw = H * W

    def edge_masks():
        # 9 boolean masks (1, hw): does tap (dh, dw) read inside the image?
        pos = lax.broadcasted_iota(jnp.int32, (1, hw), 1)
        if (W & (W - 1)) == 0:
            col = pos & (W - 1)
        else:
            col = pos % W
        masks = []
        for dh in (-1, 0, 1):
            # h + dh in [0, H)  <=>  pos + dh*W in [0, hw)
            row_ok = jnp.logical_and(pos + dh * W >= 0, pos + dh * W < hw)
            for dw in (-1, 0, 1):
                col_ok = jnp.logical_and(col + dw >= 0, col + dw < W)
                masks.append(jnp.logical_and(row_ok, col_ok))
        return masks

    def conv3x3(x2d, w, masks):
        # x2d: (C, hw) f32; w: (Co, 9*C) bf16 -> (Co, hw) f32
        # 3x3 conv, stride 1, zero padding 1, as ONE bf16 MXU matmul.
        C = x2d.shape[0]
        pad = W + 1
        z = jnp.zeros((C, pad), x2d.dtype)
        xz = jnp.concatenate([z, x2d, z], axis=1)        # (C, hw + 2*(W+1))
        pieces = []
        k = 0
        for dh in (-1, 0, 1):
            for dw in (-1, 0, 1):
                st = pad + dh * W + dw                   # static lane offset
                sh = xz[:, st:st + hw]                   # shifted (zero-filled) copy
                pieces.append(jnp.where(masks[k], sh, 0.0))
                k += 1
        im2col = jnp.concatenate(pieces, axis=0).astype(jnp.bfloat16)   # (9C, hw)
        return jnp.dot(w, im2col, preferred_element_type=jnp.float32)

    def kernel(x_ref, w1_ref, s1_ref, b1_ref, w2_ref, s2_ref, b2_ref,
               wd_ref, sd_ref, bd_ref, o_ref):
        x2d = x_ref[0]                                   # (Cin, hw) f32
        masks = edge_masks()                             # reused by both convs

        # conv1 -> bn1 -> relu
        a1 = conv3x3(x2d, w1_ref[...], masks)            # (Cmid, hw) f32
        h1 = jnp.maximum(a1 * s1_ref[...] + b1_ref[...], 0.0)

        # conv2 -> bn2
        a2 = conv3x3(h1, w2_ref[...], masks)             # (Cout, hw) f32
        h2 = a2 * s2_ref[...] + b2_ref[...]

        # downsample residual path: 1x1 conv + bn
        r = jnp.dot(wd_ref[...], x2d.astype(jnp.bfloat16),
                    preferred_element_type=jnp.float32)  # (Cout, hw)
        r = r * sd_ref[...] + bd_ref[...]

        # add + relu
        o_ref[0] = jnp.maximum(h2 + r, 0.0)

    return kernel


def basic_block_multisource(x_nchw, p):
    """x_nchw: (N, Cin, H, W) float32 -> (N, Cout, H, W) float32."""
    N, Cin, H, W = x_nchw.shape
    Cmid = p["w1"].shape[0]
    Cout = p["w2"].shape[0]
    hw = H * W

    x2 = x_nchw.reshape(N, Cin, hw)      # metadata-only reshape, no transpose

    out = pl.pallas_call(
        _make_kernel(H, W),
        out_shape=jax.ShapeDtypeStruct((N, Cout, hw), jnp.float32),
        grid_spec=pltpu.PrefetchScalarGridSpec(
            num_scalar_prefetch=0,
            grid=(N,),
            in_specs=[
                pl.BlockSpec((1, Cin, hw), lambda n: (n, 0, 0)),
                pl.BlockSpec((Cmid, 9 * Cin), lambda n: (0, 0)),
                pl.BlockSpec((Cmid, 1), lambda n: (0, 0)),
                pl.BlockSpec((Cmid, 1), lambda n: (0, 0)),
                pl.BlockSpec((Cout, 9 * Cmid), lambda n: (0, 0)),
                pl.BlockSpec((Cout, 1), lambda n: (0, 0)),
                pl.BlockSpec((Cout, 1), lambda n: (0, 0)),
                pl.BlockSpec((Cout, Cin), lambda n: (0, 0)),
                pl.BlockSpec((Cout, 1), lambda n: (0, 0)),
                pl.BlockSpec((Cout, 1), lambda n: (0, 0)),
            ],
            out_specs=pl.BlockSpec((1, Cout, hw), lambda n: (n, 0, 0)),
        ),
        # Batch axis carries no cross-step state -> shard over v7x's 2 cores;
        # harmless no-op on single-TC v5e/v6e.  Per-image VMEM footprint is a
        # few tens of KB, far below the scoped default on every generation.
        compiler_params=pltpu.CompilerParams(
            dimension_semantics=("parallel",)),
    )(x2, p["w1"], p["s1"], p["b1"], p["w2"], p["s2"], p["b2"],
      p["wd"], p["sd"], p["bd"])

    return out.reshape(N, Cout, H, W)


# ---------------------------------------------------------------------------
# Deterministic parameter construction (synthetic; mirrors module __init__).
# ---------------------------------------------------------------------------
def _mask_out_filters(w):
    # deterministic stand-in for masking_fn: keep every other output filter
    m = (jnp.arange(w.shape[0]) % 2 == 0).astype(w.dtype)
    return w * m[:, None, None, None]


def _bn_fold(key, C):
    ka, kb, km, kv = jax.random.split(key, 4)
    gamma = 1.0 + 0.1 * jax.random.normal(ka, (C,), jnp.float32)
    beta = 0.1 * jax.random.normal(kb, (C,), jnp.float32)
    mean = 0.1 * jax.random.normal(km, (C,), jnp.float32)
    var = jnp.abs(jax.random.normal(kv, (C,), jnp.float32)) + 0.5
    eps = 1e-5
    scale = gamma / jnp.sqrt(var + eps)
    bias = beta - mean * scale
    return scale, bias


def make_params(key, Cin, Cmid, Cout, num_sources=2):
    ks = jax.random.split(key, 9)
    # main-block conv weights (PyTorch OIHW), no bias (standard ResNet)
    w1_main = 0.1 * jax.random.normal(ks[0], (Cmid, Cin, 3, 3), jnp.float32)
    w2_main = 0.1 * jax.random.normal(ks[1], (Cout, Cmid, 3, 3), jnp.float32)
    wd_main = 0.1 * jax.random.normal(ks[2], (Cout, Cin, 1, 1), jnp.float32)
    # source-block conv weights
    w1_src = 0.05 * jax.random.normal(ks[3], (num_sources, Cmid, Cin, 3, 3), jnp.float32)
    w2_src = 0.05 * jax.random.normal(ks[4], (num_sources, Cout, Cmid, 3, 3), jnp.float32)
    wd_src = 0.05 * jax.random.normal(ks[5], (num_sources, Cout, Cin, 1, 1), jnp.float32)

    # Filter_Sum_Forward == conv with (masked main + sum of source) weights
    w1_eff = _mask_out_filters(w1_main) + w1_src.sum(0)
    w2_eff = _mask_out_filters(w2_main) + w2_src.sum(0)
    wd_eff = _mask_out_filters(wd_main) + wd_src.sum(0)

    s1, b1 = _bn_fold(ks[6], Cmid)   # bn1
    s2, b2 = _bn_fold(ks[7], Cout)   # bn2
    sd, bd = _bn_fold(ks[8], Cout)   # downsample bn

    def conv3x3_layout(w_oihw):
        # (O, I, 3, 3) -> (O, 9*I) bf16, contraction index = (kh*3 + kw)*I + i
        O, I = w_oihw.shape[0], w_oihw.shape[1]
        return jnp.transpose(w_oihw, (0, 2, 3, 1)).reshape(O, 9 * I).astype(jnp.bfloat16)

    p = dict(
        w1=conv3x3_layout(w1_eff), s1=s1.reshape(Cmid, 1), b1=b1.reshape(Cmid, 1),
        w2=conv3x3_layout(w2_eff), s2=s2.reshape(Cout, 1), b2=b2.reshape(Cout, 1),
        wd=wd_eff[:, :, 0, 0].astype(jnp.bfloat16),
        sd=sd.reshape(Cout, 1), bd=bd.reshape(Cout, 1),
        # keep OIHW f32 forms for the pure-JAX reference
        w1_oihw=w1_eff, w2_oihw=w2_eff, wd_oihw=wd_eff,
    )
    return p


def reference(x_nchw, p):
    dn = ("NCHW", "OIHW", "NCHW")
    prec = lax.Precision.HIGHEST
    out = lax.conv_general_dilated(x_nchw, p["w1_oihw"], (1, 1), ((1, 1), (1, 1)),
                                   dimension_numbers=dn, precision=prec)
    out = out * p["s1"].reshape(1, -1, 1, 1) + p["b1"].reshape(1, -1, 1, 1)
    out = jnp.maximum(out, 0.0)
    out = lax.conv_general_dilated(out, p["w2_oihw"], (1, 1), ((1, 1), (1, 1)),
                                   dimension_numbers=dn, precision=prec)
    out = out * p["s2"].reshape(1, -1, 1, 1) + p["b2"].reshape(1, -1, 1, 1)
    res = lax.conv_general_dilated(x_nchw, p["wd_oihw"], (1, 1), ((0, 0), (0, 0)),
                                   dimension_numbers=dn, precision=prec)
    res = res * p["sd"].reshape(1, -1, 1, 1) + p["bd"].reshape(1, -1, 1, 1)
    return jnp.maximum(out + res, 0.0)


if __name__ == "__main__":
    key = jax.random.PRNGKey(0)
    k_x, k_p = jax.random.split(key)

    N, Cin, H, W = 2, 4, 16, 16
    Cmid, Cout = 8, 8
    x = jax.random.normal(k_x, (N, Cin, H, W), jnp.float32)
    params = make_params(k_p, Cin, Cmid, Cout, num_sources=2)

    out = jax.block_until_ready(basic_block_multisource(x, params))
    ref = jax.block_until_ready(reference(x, params))

    assert out.shape == (N, Cout, H, W), out.shape
    # kernel uses bf16 MXU inputs with f32 accumulation; reference is f32 HIGHEST
    assert bool(jnp.allclose(out, ref, atol=5e-2, rtol=5e-2)), (
        float(jnp.max(jnp.abs(out - ref))))
    print("KERNEL_OK")
</pallas_src>

<mosaic_0001>
module attributes {stable_mosaic.version = 11 : i64} {
  func.func @kernel(%arg0: i32, %arg1: memref<1x4x256xf32, #tpu.memory_space<vmem>>, %arg2: memref<8x36xbf16, #tpu.memory_space<vmem>>, %arg3: memref<8x1xf32, #tpu.memory_space<vmem>>, %arg4: memref<8x1xf32, #tpu.memory_space<vmem>>, %arg5: memref<8x72xbf16, #tpu.memory_space<vmem>>, %arg6: memref<8x1xf32, #tpu.memory_space<vmem>>, %arg7: memref<8x1xf32, #tpu.memory_space<vmem>>, %arg8: memref<8x4xbf16, #tpu.memory_space<vmem>>, %arg9: memref<8x1xf32, #tpu.memory_space<vmem>>, %arg10: memref<8x1xf32, #tpu.memory_space<vmem>>, %arg11: memref<1x8x256xf32, #tpu.memory_space<vmem>>) attributes {dimension_semantics = [#tpu.dimension_semantics<parallel>], iteration_bounds = array<i64: 2>, scalar_prefetch = 0 : i64, scratch_operands = 0 : i64, tpu.core_type = #tpu.core_type<tc>, window_params = [{transform_indices = @transform_0, window_bounds = array<i64: 1, 4, 256>}, {pipeline_mode = #tpu.pipeline_mode<synchronous>, transform_indices = @transform_1, window_bounds = array<i64: 8, 36>}, {pipeline_mode = #tpu.pipeline_mode<synchronous>, transform_indices = @transform_2, window_bounds = array<i64: 8, 1>}, {pipeline_mode = #tpu.pipeline_mode<synchronous>, transform_indices = @transform_3, window_bounds = array<i64: 8, 1>}, {pipeline_mode = #tpu.pipeline_mode<synchronous>, transform_indices = @transform_4, window_bounds = array<i64: 8, 72>}, {pipeline_mode = #tpu.pipeline_mode<synchronous>, transform_indices = @transform_5, window_bounds = array<i64: 8, 1>}, {pipeline_mode = #tpu.pipeline_mode<synchronous>, transform_indices = @transform_6, window_bounds = array<i64: 8, 1>}, {pipeline_mode = #tpu.pipeline_mode<synchronous>, transform_indices = @transform_7, window_bounds = array<i64: 8, 4>}, {pipeline_mode = #tpu.pipeline_mode<synchronous>, transform_indices = @transform_8, window_bounds = array<i64: 8, 1>}, {pipeline_mode = #tpu.pipeline_mode<synchronous>, transform_indices = @transform_9, window_bounds = array<i64: 8, 1>}, {transform_indices = @transform_10, window_bounds = array<i64: 1, 8, 256>}]} {
    %c0 = arith.constant 0 : index
    %c0_0 = arith.constant 0 : index
    %c0_1 = arith.constant 0 : index
    %0 = vector.load %arg1[%c0, %c0_0, %c0_1] : memref<1x4x256xf32, #tpu.memory_space<vmem>>, vector<1x4x256xf32>
    %1 = vector.shape_cast %0 : vector<1x4x256xf32> to vector<4x256xf32>
    %2 = tpu.iota {dimensions = array<i32: 1>} : vector<1x256xi32>
    %c15_i32 = arith.constant 15 : i32
    %3 = vector.broadcast %c15_i32 : i32 to vector<1x256xi32>
    %4 = arith.andi %2, %3 : vector<1x256xi32>
    %c-16_i32 = arith.constant -16 : i32
    %5 = vector.broadcast %c-16_i32 : i32 to vector<1x256xi32>
    %6 = arith.addi %2, %5 : vector<1x256xi32>
    %c0_i32 = arith.constant 0 : i32
    %7 = vector.broadcast %c0_i32 : i32 to vector<1x256xi32>
    %8 = arith.cmpi sge, %6, %7 : vector<1x256xi32>
    %c-16_i32_2 = arith.constant -16 : i32
    %9 = vector.broadcast %c-16_i32_2 : i32 to vector<1x256xi32>
    %10 = arith.addi %2, %9 : vector<1x256xi32>
    %c256_i32 = arith.constant 256 : i32
    %11 = vector.broadcast %c256_i32 : i32 to vector<1x256xi32>
    %12 = arith.cmpi slt, %10, %11 : vector<1x256xi32>
    %13 = arith.andi %8, %12 : vector<1x256xi1>
    %c-1_i32 = arith.constant -1 : i32
    %14 = vector.broadcast %c-1_i32 : i32 to vector<1x256xi32>
    %15 = arith.addi %4, %14 : vector<1x256xi32>
    %c0_i32_3 = arith.constant 0 : i32
    %16 = vector.broadcast %c0_i32_3 : i32 to vector<1x256xi32>
    %17 = arith.cmpi sge, %15, %16 : vector<1x256xi32>
    %c-1_i32_4 = arith.constant -1 : i32
    %18 = vector.broadcast %c-1_i32_4 : i32 to vector<1x256xi32>
    %19 = arith.addi %4, %18 : vector<1x256xi32>
    %c16_i32 = arith.constant 16 : i32
    %20 = vector.broadcast %c16_i32 : i32 to vector<1x256xi32>
    %21 = arith.cmpi slt, %19, %20 : vector<1x256xi32>
    %22 = arith.andi %17, %21 : vector<1x256xi1>
    %23 = arith.andi %13, %22 : vector<1x256xi1>
    %c0_i32_5 = arith.constant 0 : i32
    %24 = vector.broadcast %c0_i32_5 : i32 to vector<1x256xi32>
    %25 = arith.addi %4, %24 : vector<1x256xi32>
    %c0_i32_6 = arith.constant 0 : i32
    %26 = vector.broadcast %c0_i32_6 : i32 to vector<1x256xi32>
    %27 = arith.cmpi sge, %25, %26 : vector<1x256xi32>
    %c0_i32_7 = arith.constant 0 : i32
    %28 = vector.broadcast %c0_i32_7 : i32 to vector<1x256xi32>
    %29 = arith.addi %4, %28 : vector<1x256xi32>
    %c16_i32_8 = arith.constant 16 : i32
    %30 = vector.broadcast %c16_i32_8 : i32 to vector<1x256xi32>
    %31 = arith.cmpi slt, %29, %30 : vector<1x256xi32>
    %32 = arith.andi %27, %31 : vector<1x256xi1>
    %33 = arith.andi %13, %32 : vector<1x256xi1>
    %c1_i32 = arith.constant 1 : i32
    %34 = vector.broadcast %c1_i32 : i32 to vector<1x256xi32>
    %35 = arith.addi %4, %34 : vector<1x256xi32>
    %c0_i32_9 = arith.constant 0 : i32
    %36 = vector.broadcast %c0_i32_9 : i32 to vector<1x256xi32>
    %37 = arith.cmpi sge, %35, %36 : vector<1x256xi32>
    %c1_i32_10 = arith.constant 1 : i32
    %38 = vector.broadcast %c1_i32_10 : i32 to vector<1x256xi32>
    %39 = arith.addi %4, %38 : vector<1x256xi32>
    %c16_i32_11 = arith.constant 16 : i32
    %40 = vector.broadcast %c16_i32_11 : i32 to vector<1x256xi32>
    %41 = arith.cmpi slt, %39, %40 : vector<1x256xi32>
    %42 = arith.andi %37, %41 : vector<1x256xi1>
    %43 = arith.andi %13, %42 : vector<1x256xi1>
    %c0_i32_12 = arith.constant 0 : i32
    %44 = vector.broadcast %c0_i32_12 : i32 to vector<1x256xi32>
    %45 = arith.addi %2, %44 : vector<1x256xi32>
    %c0_i32_13 = arith.constant 0 : i32
    %46 = vector.broadcast %c0_i32_13 : i32 to vector<1x256xi32>
    %47 = arith.cmpi sge, %45, %46 : vector<1x256xi32>
    %c0_i32_14 = arith.constant 0 : i32
    %48 = vector.broadcast %c0_i32_14 : i32 to vector<1x256xi32>
    %49 = arith.addi %2, %48 : vector<1x256xi32>
    %c256_i32_15 = arith.constant 256 : i32
    %50 = vector.broadcast %c256_i32_15 : i32 to vector<1x256xi32>
    %51 = arith.cmpi slt, %49, %50 : vector<1x256xi32>
    %52 = arith.andi %47, %51 : vector<1x256xi1>
    %c-1_i32_16 = arith.constant -1 : i32
    %53 = vector.broadcast %c-1_i32_16 : i32 to vector<1x256xi32>
    %54 = arith.addi %4, %53 : vector<1x256xi32>
    %c0_i32_17 = arith.constant 0 : i32
    %55 = vector.broadcast %c0_i32_17 : i32 to vector<1x256xi32>
    %56 = arith.cmpi sge, %54, %55 : vector<1x256xi32>
    %c-1_i32_18 = arith.constant -1 : i32
    %57 = vector.broadcast %c-1_i32_18 : i32 to vector<1x256xi32>
    %58 = arith.addi %4, %57 : vector<1x256xi32>
    %c16_i32_19 = arith.constant 16 : i32
    %59 = vector.broadcast %c16_i32_19 : i32 to vector<1x256xi32>
    %60 = arith.cmpi slt, %58, %59 : vector<1x256xi32>
    %61 = arith.andi %56, %60 : vector<1x256xi1>
    %62 = arith.andi %52, %61 : vector<1x256xi1>
    %c0_i32_20 = arith.constant 0 : i32
    %63 = vector.broadcast %c0_i32_20 : i32 to vector<1x256xi32>
    %64 = arith.addi %4, %63 : vector<1x256xi32>
    %c0_i32_21 = arith.constant 0 : i32
    %65 = vector.broadcast %c0_i32_21 : i32 to vector<1x256xi32>
    %66 = arith.cmpi sge, %64, %65 : vector<1x256xi32>
    %c0_i32_22 = arith.constant 0 : i32
    %67 = vector.broadcast %c0_i32_22 : i32 to vector<1x256xi32>
    %68 = arith.addi %4, %67 : vector<1x256xi32>
    %c16_i32_23 = arith.constant 16 : i32
    %69 = vector.broadcast %c16_i32_23 : i32 to vector<1x256xi32>
    %70 = arith.cmpi slt, %68, %69 : vector<1x256xi32>
    %71 = arith.andi %66, %70 : vector<1x256xi1>
    %72 = arith.andi %52, %71 : vector<1x256xi1>
    %c1_i32_24 = arith.constant 1 : i32
    %73 = vector.broadcast %c1_i32_24 : i32 to vector<1x256xi32>
    %74 = arith.addi %4, %73 : vector<1x256xi32>
    %c0_i32_25 = arith.constant 0 : i32
    %75 = vector.broadcast %c0_i32_25 : i32 to vector<1x256xi32>
    %76 = arith.cmpi sge, %74, %75 : vector<1x256xi32>
    %c1_i32_26 = arith.constant 1 : i32
    %77 = vector.broadcast %c1_i32_26 : i32 to vector<1x256xi32>
    %78 = arith.addi %4, %77 : vector<1x256xi32>
    %c16_i32_27 = arith.constant 16 : i32
    %79 = vector.broadcast %c16_i32_27 : i32 to vector<1x256xi32>
    %80 = arith.cmpi slt, %78, %79 : vector<1x256xi32>
    %81 = arith.andi %76, %80 : vector<1x256xi1>
    %82 = arith.andi %52, %81 : vector<1x256xi1>
    %c16_i32_28 = arith.constant 16 : i32
    %83 = vector.broadcast %c16_i32_28 : i32 to vector<1x256xi32>
    %84 = arith.addi %2, %83 : vector<1x256xi32>
    %c0_i32_29 = arith.constant 0 : i32
    %85 = vector.broadcast %c0_i32_29 : i32 to vector<1x256xi32>
    %86 = arith.cmpi sge, %84, %85 : vector<1x256xi32>
    %c16_i32_30 = arith.constant 16 : i32
    %87 = vector.broadcast %c16_i32_30 : i32 to vector<1x256xi32>
    %88 = arith.addi %2, %87 : vector<1x256xi32>
    %c256_i32_31 = arith.constant 256 : i32
    %89 = vector.broadcast %c256_i32_31 : i32 to vector<1x256xi32>
    %90 = arith.cmpi slt, %88, %89 : vector<1x256xi32>
    %91 = arith.andi %86, %90 : vector<1x256xi1>
    %c-1_i32_32 = arith.constant -1 : i32
    %92 = vector.broadcast %c-1_i32_32 : i32 to vector<1x256xi32>
    %93 = arith.addi %4, %92 : vector<1x256xi32>
    %c0_i32_33 = arith.constant 0 : i32
    %94 = vector.broadcast %c0_i32_33 : i32 to vector<1x256xi32>
    %95 = arith.cmpi sge, %93, %94 : vector<1x256xi32>
    %c-1_i32_34 = arith.constant -1 : i32
    %96 = vector.broadcast %c-1_i32_34 : i32 to vector<1x256xi32>
    %97 = arith.addi %4, %96 : vector<1x256xi32>
    %c16_i32_35 = arith.constant 16 : i32
    %98 = vector.broadcast %c16_i32_35 : i32 to vector<1x256xi32>
    %99 = arith.cmpi slt, %97, %98 : vector<1x256xi32>
    %100 = arith.andi %95, %99 : vector<1x256xi1>
    %101 = arith.andi %91, %100 : vector<1x256xi1>
    %c0_i32_36 = arith.constant 0 : i32
    %102 = vector.broadcast %c0_i32_36 : i32 to vector<1x256xi32>
    %103 = arith.addi %4, %102 : vector<1x256xi32>
    %c0_i32_37 = arith.constant 0 : i32
    %104 = vector.broadcast %c0_i32_37 : i32 to vector<1x256xi32>
    %105 = arith.cmpi sge, %103, %104 : vector<1x256xi32>
    %c0_i32_38 = arith.constant 0 : i32
    %106 = vector.broadcast %c0_i32_38 : i32 to vector<1x256xi32>
    %107 = arith.addi %4, %106 : vector<1x256xi32>
    %c16_i32_39 = arith.constant 16 : i32
    %108 = vector.broadcast %c16_i32_39 : i32 to vector<1x256xi32>
    %109 = arith.cmpi slt, %107, %108 : vector<1x256xi32>
    %110 = arith.andi %105, %109 : vector<1x256xi1>
    %111 = arith.andi %91, %110 : vector<1x256xi1>
    %c1_i32_40 = arith.constant 1 : i32
    %112 = vector.broadcast %c1_i32_40 : i32 to vector<1x256xi32>
    %113 = arith.addi %4, %112 : vector<1x256xi32>
    %c0_i32_41 = arith.constant 0 : i32
    %114 = vector.broadcast %c0_i32_41 : i32 to vector<1x256xi32>
    %115 = arith.cmpi sge, %113, %114 : vector<1x256xi32>
    %c1_i32_42 = arith.constant 1 : i32
    %116 = vector.broadcast %c1_i32_42 : i32 to vector<1x256xi32>
    %117 = arith.addi %4, %116 : vector<1x256xi32>
    %c16_i32_43 = arith.constant 16 : i32
    %118 = vector.broadcast %c16_i32_43 : i32 to vector<1x256xi32>
    %119 = arith.cmpi slt, %117, %118 : vector<1x256xi32>
    %120 = arith.andi %115, %119 : vector<1x256xi1>
    %121 = arith.andi %91, %120 : vector<1x256xi1>
    %c0_44 = arith.constant 0 : index
    %c0_45 = arith.constant 0 : index
    %122 = vector.load %arg2[%c0_44, %c0_45] : memref<8x36xbf16, #tpu.memory_space<vmem>>, vector<8x36xbf16>
    %cst = arith.constant 0.000000e+00 : f32
    %123 = vector.broadcast %cst : f32 to vector<4x17xf32>
    %124 = tpu.concatenate %123, %1, %123 in 1 : vector<4x17xf32>, vector<4x256xf32>, vector<4x17xf32> -> vector<4x290xf32>
    %125 = vector.extract_strided_slice %124 {offsets = [0, 0], sizes = [4, 256], strides = [1, 1]} : vector<4x290xf32> to vector<4x256xf32>
    %cst_46 = arith.constant 0.000000e+00 : f32
    %126 = vector.shape_cast %23 : vector<1x256xi1> to vector<1x256xi1>
    %127 = vector.broadcast %126 : vector<1x256xi1> to vector<4x256xi1>
    %128 = vector.broadcast %cst_46 : f32 to vector<4x256xf32>
    %129 = arith.select %127, %125, %128 : vector<4x256xi1>, vector<4x256xf32>
    %130 = vector.extract_strided_slice %124 {offsets = [0, 1], sizes = [4, 256], strides = [1, 1]} : vector<4x290xf32> to vector<4x256xf32>
    %cst_47 = arith.constant 0.000000e+00 : f32
    %131 = vector.shape_cast %33 : vector<1x256xi1> to vector<1x256xi1>
    %132 = vector.broadcast %131 : vector<1x256xi1> to vector<4x256xi1>
    %133 = vector.broadcast %cst_47 : f32 to vector<4x256xf32>
    %134 = arith.select %132, %130, %133 : vector<4x256xi1>, vector<4x256xf32>
    %135 = vector.extract_strided_slice %124 {offsets = [0, 2], sizes = [4, 256], strides = [1, 1]} : vector<4x290xf32> to vector<4x256xf32>
    %cst_48 = arith.constant 0.000000e+00 : f32
    %136 = vector.shape_cast %43 : vector<1x256xi1> to vector<1x256xi1>
    %137 = vector.broadcast %136 : vector<1x256xi1> to vector<4x256xi1>
    %138 = vector.broadcast %cst_48 : f32 to vector<4x256xf32>
    %139 = arith.select %137, %135, %138 : vector<4x256xi1>, vector<4x256xf32>
    %140 = vector.extract_strided_slice %124 {offsets = [0, 16], sizes = [4, 256], strides = [1, 1]} : vector<4x290xf32> to vector<4x256xf32>
    %cst_49 = arith.constant 0.000000e+00 : f32
    %141 = vector.shape_cast %62 : vector<1x256xi1> to vector<1x256xi1>
    %142 = vector.broadcast %141 : vector<1x256xi1> to vector<4x256xi1>
    %143 = vector.broadcast %cst_49 : f32 to vector<4x256xf32>
    %144 = arith.select %142, %140, %143 : vector<4x256xi1>, vector<4x256xf32>
    %145 = vector.extract_strided_slice %124 {offsets = [0, 17], sizes = [4, 256], strides = [1, 1]} : vector<4x290xf32> to vector<4x256xf32>
    %cst_50 = arith.constant 0.000000e+00 : f32
    %146 = vector.shape_cast %72 : vector<1x256xi1> to vector<1x256xi1>
    %147 = vector.broadcast %146 : vector<1x256xi1> to vector<4x256xi1>
    %148 = vector.broadcast %cst_50 : f32 to vector<4x256xf32>
    %149 = arith.select %147, %145, %148 : vector<4x256xi1>, vector<4x256xf32>
    %150 = vector.extract_strided_slice %124 {offsets = [0, 18], sizes = [4, 256], strides = [1, 1]} : vector<4x290xf32> to vector<4x256xf32>
    %cst_51 = arith.constant 0.000000e+00 : f32
    %151 = vector.shape_cast %82 : vector<1x256xi1> to vector<1x256xi1>
    %152 = vector.broadcast %151 : vector<1x256xi1> to vector<4x256xi1>
    %153 = vector.broadcast %cst_51 : f32 to vector<4x256xf32>
    %154 = arith.select %152, %150, %153 : vector<4x256xi1>, vector<4x256xf32>
    %155 = vector.extract_strided_slice %124 {offsets = [0, 32], sizes = [4, 256], strides = [1, 1]} : vector<4x290xf32> to vector<4x256xf32>
    %cst_52 = arith.constant 0.000000e+00 : f32
    %156 = vector.shape_cast %101 : vector<1x256xi1> to vector<1x256xi1>
    %157 = vector.broadcast %156 : vector<1x256xi1> to vector<4x256xi1>
    %158 = vector.broadcast %cst_52 : f32 to vector<4x256xf32>
    %159 = arith.select %157, %155, %158 : vector<4x256xi1>, vector<4x256xf32>
    %160 = vector.extract_strided_slice %124 {offsets = [0, 33], sizes = [4, 256], strides = [1, 1]} : vector<4x290xf32> to vector<4x256xf32>
    %cst_53 = arith.constant 0.000000e+00 : f32
    %161 = vector.shape_cast %111 : vector<1x256xi1> to vector<1x256xi1>
    %162 = vector.broadcast %161 : vector<1x256xi1> to vector<4x256xi1>
    %163 = vector.broadcast %cst_53 : f32 to vector<4x256xf32>
    %164 = arith.select %162, %160, %163 : vector<4x256xi1>, vector<4x256xf32>
    %165 = vector.extract_strided_slice %124 {offsets = [0, 34], sizes = [4, 256], strides = [1, 1]} : vector<4x290xf32> to vector<4x256xf32>
    %cst_54 = arith.constant 0.000000e+00 : f32
    %166 = vector.shape_cast %121 : vector<1x256xi1> to vector<1x256xi1>
    %167 = vector.broadcast %166 : vector<1x256xi1> to vector<4x256xi1>
    %168 = vector.broadcast %cst_54 : f32 to vector<4x256xf32>
    %169 = arith.select %167, %165, %168 : vector<4x256xi1>, vector<4x256xf32>
    %170 = tpu.concatenate %129, %134, %139, %144, %149, %154, %159, %164, %169 in 0 : vector<4x256xf32>, vector<4x256xf32>, vector<4x256xf32>, vector<4x256xf32>, vector<4x256xf32>, vector<4x256xf32>, vector<4x256xf32>, vector<4x256xf32>, vector<4x256xf32> -> vector<36x256xf32>
    %171 = arith.truncf %170 : vector<36x256xf32> to vector<36x256xbf16>
    %cst_55 = arith.constant dense<0.000000e+00> : vector<8x256xf32>
    %172 = tpu.matmul %122, %171, %cst_55 {dimension_numbers = #tpu.dot_dimension_numbers<[1], [0], [0], [1], [0, 0, 1, 1], [], []>} : vector<8x36xbf16>, vector<36x256xbf16>, vector<8x256xf32> -> vector<8x256xf32>
    %c0_56 = arith.constant 0 : index
    %c0_57 = arith.constant 0 : index
    %173 = vector.load %arg3[%c0_56, %c0_57] : memref<8x1xf32, #tpu.memory_space<vmem>>, vector<8x1xf32>
    %174 = vector.broadcast %173 : vector<8x1xf32> to vector<8x256xf32>
    %175 = arith.mulf %172, %174 : vector<8x256xf32>
    %c0_58 = arith.constant 0 : index
    %c0_59 = arith.constant 0 : index
    %176 = vector.load %arg4[%c0_58, %c0_59] : memref<8x1xf32, #tpu.memory_space<vmem>>, vector<8x1xf32>
    %177 = vector.broadcast %176 : vector<8x1xf32> to vector<8x256xf32>
    %178 = arith.addf %175, %177 : vector<8x256xf32>
    %cst_60 = arith.constant 0.000000e+00 : f32
    %179 = vector.broadcast %cst_60 : f32 to vector<8x256xf32>
    %180 = arith.maximumf %178, %179 : vector<8x256xf32>
    %c0_61 = arith.constant 0 : index
    %c0_62 = arith.constant 0 : index
    %181 = vector.load %arg5[%c0_61, %c0_62] : memref<8x72xbf16, #tpu.memory_space<vmem>>, vector<8x72xbf16>
    %cst_63 = arith.constant 0.000000e+00 : f32
    %182 = vector.broadcast %cst_63 : f32 to vector<8x17xf32>
    %183 = tpu.concatenate %182, %180, %182 in 1 : vector<8x17xf32>, vector<8x256xf32>, vector<8x17xf32> -> vector<8x290xf32>
    %184 = vector.extract_strided_slice %183 {offsets = [0, 0], sizes = [8, 256], strides = [1, 1]} : vector<8x290xf32> to vector<8x256xf32>
    %cst_64 = arith.constant 0.000000e+00 : f32
    %185 = vector.shape_cast %23 : vector<1x256xi1> to vector<1x256xi1>
    %186 = vector.broadcast %185 : vector<1x256xi1> to vector<8x256xi1>
    %187 = vector.broadcast %cst_64 : f32 to vector<8x256xf32>
    %188 = arith.select %186, %184, %187 : vector<8x256xi1>, vector<8x256xf32>
    %189 = vector.extract_strided_slice %183 {offsets = [0, 1], sizes = [8, 256], strides = [1, 1]} : vector<8x290xf32> to vector<8x256xf32>
    %cst_65 = arith.constant 0.000000e+00 : f32
    %190 = vector.shape_cast %33 : vector<1x256xi1> to vector<1x256xi1>
    %191 = vector.broadcast %190 : vector<1x256xi1> to vector<8x256xi1>
    %192 = vector.broadcast %cst_65 : f32 to vector<8x256xf32>
    %193 = arith.select %191, %189, %192 : vector<8x256xi1>, vector<8x256xf32>
    %194 = vector.extract_strided_slice %183 {offsets = [0, 2], sizes = [8, 256], strides = [1, 1]} : vector<8x290xf32> to vector<8x256xf32>
    %cst_66 = arith.constant 0.000000e+00 : f32
    %195 = vector.shape_cast %43 : vector<1x256xi1> to vector<1x256xi1>
    %196 = vector.broadcast %195 : vector<1x256xi1> to vector<8x256xi1>
    %197 = vector.broadcast %cst_66 : f32 to vector<8x256xf32>
    %198 = arith.select %196, %194, %197 : vector<8x256xi1>, vector<8x256xf32>
    %199 = vector.extract_strided_slice %183 {offsets = [0, 16], sizes = [8, 256], strides = [1, 1]} : vector<8x290xf32> to vector<8x256xf32>
    %cst_67 = arith.constant 0.000000e+00 : f32
    %200 = vector.shape_cast %62 : vector<1x256xi1> to vector<1x256xi1>
    %201 = vector.broadcast %200 : vector<1x256xi1> to vector<8x256xi1>
    %202 = vector.broadcast %cst_67 : f32 to vector<8x256xf32>
    %203 = arith.select %201, %199, %202 : vector<8x256xi1>, vector<8x256xf32>
    %204 = vector.extract_strided_slice %183 {offsets = [0, 17], sizes = [8, 256], strides = [1, 1]} : vector<8x290xf32> to vector<8x256xf32>
    %cst_68 = arith.constant 0.000000e+00 : f32
    %205 = vector.shape_cast %72 : vector<1x256xi1> to vector<1x256xi1>
    %206 = vector.broadcast %205 : vector<1x256xi1> to vector<8x256xi1>
    %207 = vector.broadcast %cst_68 : f32 to vector<8x256xf32>
    %208 = arith.select %206, %204, %207 : vector<8x256xi1>, vector<8x256xf32>
    %209 = vector.extract_strided_slice %183 {offsets = [0, 18], sizes = [8, 256], strides = [1, 1]} : vector<8x290xf32> to vector<8x256xf32>
    %cst_69 = arith.constant 0.000000e+00 : f32
    %210 = vector.shape_cast %82 : vector<1x256xi1> to vector<1x256xi1>
    %211 = vector.broadcast %210 : vector<1x256xi1> to vector<8x256xi1>
    %212 = vector.broadcast %cst_69 : f32 to vector<8x256xf32>
    %213 = arith.select %211, %209, %212 : vector<8x256xi1>, vector<8x256xf32>
    %214 = vector.extract_strided_slice %183 {offsets = [0, 32], sizes = [8, 256], strides = [1, 1]} : vector<8x290xf32> to vector<8x256xf32>
    %cst_70 = arith.constant 0.000000e+00 : f32
    %215 = vector.shape_cast %101 : vector<1x256xi1> to vector<1x256xi1>
    %216 = vector.broadcast %215 : vector<1x256xi1> to vector<8x256xi1>
    %217 = vector.broadcast %cst_70 : f32 to vector<8x256xf32>
    %218 = arith.select %216, %214, %217 : vector<8x256xi1>, vector<8x256xf32>
    %219 = vector.extract_strided_slice %183 {offsets = [0, 33], sizes = [8, 256], strides = [1, 1]} : vector<8x290xf32> to vector<8x256xf32>
    %cst_71 = arith.constant 0.000000e+00 : f32
    %220 = vector.shape_cast %111 : vector<1x256xi1> to vector<1x256xi1>
    %221 = vector.broadcast %220 : vector<1x256xi1> to vector<8x256xi1>
    %222 = vector.broadcast %cst_71 : f32 to vector<8x256xf32>
    %223 = arith.select %221, %219, %222 : vector<8x256xi1>, vector<8x256xf32>
    %224 = vector.extract_strided_slice %183 {offsets = [0, 34], sizes = [8, 256], strides = [1, 1]} : vector<8x290xf32> to vector<8x256xf32>
    %cst_72 = arith.constant 0.000000e+00 : f32
    %225 = vector.shape_cast %121 : vector<1x256xi1> to vector<1x256xi1>
    %226 = vector.broadcast %225 : vector<1x256xi1> to vector<8x256xi1>
    %227 = vector.broadcast %cst_72 : f32 to vector<8x256xf32>
    %228 = arith.select %226, %224, %227 : vector<8x256xi1>, vector<8x256xf32>
    %229 = tpu.concatenate %188, %193, %198, %203, %208, %213, %218, %223, %228 in 0 : vector<8x256xf32>, vector<8x256xf32>, vector<8x256xf32>, vector<8x256xf32>, vector<8x256xf32>, vector<8x256xf32>, vector<8x256xf32>, vector<8x256xf32>, vector<8x256xf32> -> vector<72x256xf32>
    %230 = arith.truncf %229 : vector<72x256xf32> to vector<72x256xbf16>
    %cst_73 = arith.constant dense<0.000000e+00> : vector<8x256xf32>
    %231 = tpu.matmul %181, %230, %cst_73 {dimension_numbers = #tpu.dot_dimension_numbers<[1], [0], [0], [1], [0, 0, 1, 1], [], []>} : vector<8x72xbf16>, vector<72x256xbf16>, vector<8x256xf32> -> vector<8x256xf32>
    %c0_74 = arith.constant 0 : index
    %c0_75 = arith.constant 0 : index
    %232 = vector.load %arg6[%c0_74, %c0_75] : memref<8x1xf32, #tpu.memory_space<vmem>>, vector<8x1xf32>
    %233 = vector.broadcast %232 : vector<8x1xf32> to vector<8x256xf32>
    %234 = arith.mulf %231, %233 : vector<8x256xf32>
    %c0_76 = arith.constant 0 : index
    %c0_77 = arith.constant 0 : index
    %235 = vector.load %arg7[%c0_76, %c0_77] : memref<8x1xf32, #tpu.memory_space<vmem>>, vector<8x1xf32>
    %236 = vector.broadcast %235 : vector<8x1xf32> to vector<8x256xf32>
    %237 = arith.addf %234, %236 : vector<8x256xf32>
    %c0_78 = arith.constant 0 : index
    %c0_79 = arith.constant 0 : index
    %238 = vector.load %arg8[%c0_78, %c0_79] : memref<8x4xbf16, #tpu.memory_space<vmem>>, vector<8x4xbf16>
    %239 = arith.truncf %1 : vector<4x256xf32> to vector<4x256xbf16>
    %cst_80 = arith.constant dense<0.000000e+00> : vector<8x256xf32>
    %240 = tpu.matmul %238, %239, %cst_80 {dimension_numbers = #tpu.dot_dimension_numbers<[1], [0], [0], [1], [0, 0, 1, 1], [], []>} : vector<8x4xbf16>, vector<4x256xbf16>, vector<8x256xf32> -> vector<8x256xf32>
    %c0_81 = arith.constant 0 : index
    %c0_82 = arith.constant 0 : index
    %241 = vector.load %arg9[%c0_81, %c0_82] : memref<8x1xf32, #tpu.memory_space<vmem>>, vector<8x1xf32>
    %242 = vector.broadcast %241 : vector<8x1xf32> to vector<8x256xf32>
    %243 = arith.mulf %240, %242 : vector<8x256xf32>
    %c0_83 = arith.constant 0 : index
    %c0_84 = arith.constant 0 : index
    %244 = vector.load %arg10[%c0_83, %c0_84] : memref<8x1xf32, #tpu.memory_space<vmem>>, vector<8x1xf32>
    %245 = vector.broadcast %244 : vector<8x1xf32> to vector<8x256xf32>
    %246 = arith.addf %243, %245 : vector<8x256xf32>
    %247 = arith.addf %237, %246 : vector<8x256xf32>
    %cst_85 = arith.constant 0.000000e+00 : f32
    %248 = vector.broadcast %cst_85 : f32 to vector<8x256xf32>
    %249 = arith.maximumf %247, %248 : vector<8x256xf32>
    %c0_86 = arith.constant 0 : index
    %c0_87 = arith.constant 0 : index
    %c0_88 = arith.constant 0 : index
    %250 = vector.load %arg11[%c0_86, %c0_87, %c0_88] : memref<1x8x256xf32, #tpu.memory_space<vmem>>, vector<1x8x256xf32>
    %251 = vector.shape_cast %250 : vector<1x8x256xf32> to vector<8x256xf32>
    %252 = vector.shape_cast %249 : vector<8x256xf32> to vector<1x8x256xf32>
    tpu.vector_store %arg11[%c0_86, %c0_87, %c0_88], %252 {strides = array<i32>} : memref<1x8x256xf32, #tpu.memory_space<vmem>>, vector<1x8x256xf32>,
    return
  }
  func.func @transform_0(%arg0: i32) -> (i32, i32, i32) {
    %c0_i32 = arith.constant 0 : i32
    %c0_i32_0 = arith.constant 0 : i32
    %c0_i32_1 = arith.constant 0 : i32
    return %arg0, %c0_i32, %c0_i32_0 : i32, i32, i32
  }
  func.func @transform_1(%arg0: i32) -> (i32, i32) {
    %c0_i32 = arith.constant 0 : i32
    %c0_i32_0 = arith.constant 0 : i32
    %c0_i32_1 = arith.constant 0 : i32
    return %c0_i32, %c0_i32_0 : i32, i32
  }
  func.func @transform_2(%arg0: i32) -> (i32, i32) {
    %c0_i32 = arith.constant 0 : i32
    %c0_i32_0 = arith.constant 0 : i32
    %c0_i32_1 = arith.constant 0 : i32
    return %c0_i32, %c0_i32_0 : i32, i32
  }
  func.func @transform_3(%arg0: i32) -> (i32, i32) {
    %c0_i32 = arith.constant 0 : i32
    %c0_i32_0 = arith.constant 0 : i32
    %c0_i32_1 = arith.constant 0 : i32
    return %c0_i32, %c0_i32_0 : i32, i32
  }
  func.func @transform_4(%arg0: i32) -> (i32, i32) {
    %c0_i32 = arith.constant 0 : i32
    %c0_i32_0 = arith.constant 0 : i32
    %c0_i32_1 = arith.constant 0 : i32
    return %c0_i32, %c0_i32_0 : i32, i32
  }
  func.func @transform_5(%arg0: i32) -> (i32, i32) {
    %c0_i32 = arith.constant 0 : i32
    %c0_i32_0 = arith.constant 0 : i32
    %c0_i32_1 = arith.constant 0 : i32
    return %c0_i32, %c0_i32_0 : i32, i32
  }
  func.func @transform_6(%arg0: i32) -> (i32, i32) {
    %c0_i32 = arith.constant 0 : i32
    %c0_i32_0 = arith.constant 0 : i32
    %c0_i32_1 = arith.constant 0 : i32
    return %c0_i32, %c0_i32_0 : i32, i32
  }
  func.func @transform_7(%arg0: i32) -> (i32, i32) {
    %c0_i32 = arith.constant 0 : i32
    %c0_i32_0 = arith.constant 0 : i32
    %c0_i32_1 = arith.constant 0 : i32
    return %c0_i32, %c0_i32_0 : i32, i32
  }
  func.func @transform_8(%arg0: i32) -> (i32, i32) {
    %c0_i32 = arith.constant 0 : i32
    %c0_i32_0 = arith.constant 0 : i32
    %c0_i32_1 = arith.constant 0 : i32
    return %c0_i32, %c0_i32_0 : i32, i32
  }
  func.func @transform_9(%arg0: i32) -> (i32, i32) {
    %c0_i32 = arith.constant 0 : i32
    %c0_i32_0 = arith.constant 0 : i32
    %c0_i32_1 = arith.constant 0 : i32
    return %c0_i32, %c0_i32_0 : i32, i32
  }
  func.func @transform_10(%arg0: i32) -> (i32, i32, i32) {
    %c0_i32 = arith.constant 0 : i32
    %c0_i32_0 = arith.constant 0 : i32
    %c0_i32_1 = arith.constant 0 : i32
    return %arg0, %c0_i32, %c0_i32_0 : i32, i32, i32
  }
}

</mosaic_0001>

<llo_original>
// kernel: tpu_custom_call.1
$region0: #{tpu_custom_call.1}
  #allocation0 [shape = 'u32[]', space=smem, size = 0x4, offset = 0x4, fixed_abs, tag = 'smem constant byte address 0x4 - core index']
  #allocation1 [shape = 'u32[144,128]{1,0:T(1,128)}', space=vmem, size = 0x12000, scoped, tag = 'internal scratch']
  %s0 = inlined_call_operand.vmem [shape: f32[2,4,256], index: 0, kind: input, shape index: {}]
  %s1 = inlined_call_operand.vmem [shape: bf16[8,36], index: 1, kind: input, shape index: {}]
  %s2 = inlined_call_operand.vmem [shape: f32[8,1], index: 2, kind: input, shape index: {}]
  %s3 = inlined_call_operand.vmem [shape: f32[8,1], index: 3, kind: input, shape index: {}]
  %s4 = inlined_call_operand.vmem [shape: bf16[8,72], index: 4, kind: input, shape index: {}]
  %s5 = inlined_call_operand.vmem [shape: f32[8,1], index: 5, kind: input, shape index: {}]
  %s6 = inlined_call_operand.vmem [shape: f32[8,1], index: 6, kind: input, shape index: {}]
  %s7 = inlined_call_operand.vmem [shape: bf16[8,4], index: 7, kind: input, shape index: {}]
  %s8 = inlined_call_operand.vmem [shape: f32[8,1], index: 8, kind: input, shape index: {}]
  %s9 = inlined_call_operand.vmem [shape: f32[8,1], index: 9, kind: input, shape index: {}]
  %s10 = inlined_call_operand.hbm [shape: f32[2,8,256], index: 10, kind: output, shape index: {}]
  %s11 = sld [smem:[#allocation0]]
  $region73: #{tpu_custom_call.1} parent=0
    _
  %s13 = ssub.s32 1, %s11
  %s14 = scalar_select 0, %s13, %s11
  $region1: #{tpu_custom_call.1} parent=0
    #allocation2 [shape = 'u8[16384]{0}', space=vmem, size = 0x4000, scoped, tag = 'output window, operand 0']
    #allocation3 [shape = 's32[2]{0}', space=sflag, size = 0x8, scoped, tag = 'scoped memory for tpu_custom_call.1']
    %15 = vsyncpa [#allocation3], 0
    %s16 = scalar_lea.sflag [#allocation3], 1
    %17 = vsyncpa %s16, 0
    loop: start=0, step=1, limit=4
    $region2: #{tpu_custom_call.1} parent=1 // loop_pre_header
      _
    $region3: #{tpu_custom_call.1} parent=1 // loop_header
      %s19 = sphi 0, %s23
      %p20 = scmp.ge.s32.totalorder %s19, 4
      %s29 = sphi 0, %s31
      %s32 = sphi 0, %s29
      %s33 = sphi 0, %s32
      %s49 = sphi 0, %s33
      %s53 = sphi 0, %s53
      %s55 = sphi 0, %s53
      %s56 = sphi 0, %s55
      %s70 = sphi 0, %s56
      %s74 = sphi 0, %s74
      %s76 = sphi 0, %s74
      %s77 = sphi 0, %s76
      %s91 = sphi 0, %s77
      %s95 = sphi 0, %s95
      %s97 = sphi 0, %s95
      %s98 = sphi 0, %s97
      %s112 = sphi 0, %s98
      %s116 = sphi 0, %s116
      %s118 = sphi 0, %s116
      %s119 = sphi 0, %s118
      %s133 = sphi 0, %s119
      %s137 = sphi 0, %s137
      %s139 = sphi 0, %s137
      %s140 = sphi 0, %s139
      %s154 = sphi 0, %s140
      %s158 = sphi 0, %s158
      %s160 = sphi 0, %s158
      %s161 = sphi 0, %s160
      %s175 = sphi 0, %s161
      %s179 = sphi 0, %s179
      %s181 = sphi 0, %s179
      %s182 = sphi 0, %s181
      %s196 = sphi 0, %s182
      %s200 = sphi 0, %s200
      %s202 = sphi 0, %s200
      %s203 = sphi 0, %s202
      %s217 = sphi 0, %s203
      %s221 = sphi 0, %s221
      %s223 = sphi 0, %s221
      %s224 = sphi 0, %s223
      %s238 = sphi 0, %s224
      %s244 = sphi 0, %s246
      %s247 = sphi 0, %s244
      %s248 = sphi 0, %s247
      %s264 = sphi 0, %s248
    $region4: #{tpu_custom_call.1} parent=1 // loop_header_branch
      %22 = sbr.rel (%p20) target = $region8
    $region5: #{tpu_custom_call.1} parent=1 // loop_body
      %s24 = ssub.s32 %s19, 1
      %s25 = ssub.s32 %s19, 2
      %s26 = sadd.s32 %s19, 1
      %s27 = ssub.s32 %s19, %s26
      %p28 = scmp.eq.s32.totalorder %s27, 0
      %s30 = sadd.s32 %s29, 1
      %s31 = scalar_select %p28, %s29, %s30
      %p34 = pneg %p28
      %p35 = scmp.eq.s32.totalorder %s19, 1
      %p36 = por %p34, %p35
      %p37 = scmp.ne.s32.totalorder %s29, %s32
      %p38 = scmp.eq.s32.totalorder %s19, 0
      %p39 = por %p37, %p38
      %p40 = scmp.ne.s32.totalorder %s29, %s32
      %p41 = scmp.eq.s32.totalorder %s24, 1
      %p42 = por %p40, %p41
      %p43 = scmp.ne.s32.totalorder %s32, %s33
      %p44 = scmp.eq.s32.totalorder %s24, 0
      %p45 = por %p43, %p44
      %p46 = scmp.ne.s32.totalorder %s32, %s33
      %p47 = scmp.eq.s32.totalorder %s25, 1
      %p48 = por %p46, %p47
      %p50 = scmp.ne.s32.totalorder %s33, %s49
      %p51 = scmp.eq.s32.totalorder %s25, 0
      %p52 = por %p50, %p51
      %s54 = sadd.s32 %s53, 1
      %p57 = scmp.eq.s32.totalorder %s19, 1
      %p58 = scmp.ne.s32.totalorder %s53, %s55
      %p59 = scmp.eq.s32.totalorder %s19, 0
      %p60 = por %p58, %p59
      %p61 = scmp.ne.s32.totalorder %s53, %s55
      %p62 = scmp.eq.s32.totalorder %s24, 1
      %p63 = por %p61, %p62
      %p64 = scmp.ne.s32.totalorder %s55, %s56
      %p65 = scmp.eq.s32.totalorder %s24, 0
      %p66 = por %p64, %p65
      %p67 = scmp.ne.s32.totalorder %s55, %s56
      %p68 = scmp.eq.s32.totalorder %s25, 1
      %p69 = por %p67, %p68
      %p71 = scmp.ne.s32.totalorder %s56, %s70
      %p72 = scmp.eq.s32.totalorder %s25, 0
      %p73 = por %p71, %p72
      %s75 = sadd.s32 %s74, 1
      %p78 = scmp.eq.s32.totalorder %s19, 1
      %p79 = scmp.ne.s32.totalorder %s74, %s76
      %p80 = scmp.eq.s32.totalorder %s19, 0
      %p81 = por %p79, %p80
      %p82 = scmp.ne.s32.totalorder %s74, %s76
      %p83 = scmp.eq.s32.totalorder %s24, 1
      %p84 = por %p82, %p83
      %p85 = scmp.ne.s32.totalorder %s76, %s77
      %p86 = scmp.eq.s32.totalorder %s24, 0
      %p87 = por %p85, %p86
      %p88 = scmp.ne.s32.totalorder %s76, %s77
      %p89 = scmp.eq.s32.totalorder %s25, 1
      %p90 = por %p88, %p89
      %p92 = scmp.ne.s32.totalorder %s77, %s91
      %p93 = scmp.eq.s32.totalorder %s25, 0
      %p94 = por %p92, %p93
      %s96 = sadd.s32 %s95, 1
      %p99 = scmp.eq.s32.totalorder %s19, 1
      %p100 = scmp.ne.s32.totalorder %s95, %s97
      %p101 = scmp.eq.s32.totalorder %s19, 0
      %p102 = por %p100, %p101
      %p103 = scmp.ne.s32.totalorder %s95, %s97
      %p104 = scmp.eq.s32.totalorder %s24, 1
      %p105 = por %p103, %p104
      %p106 = scmp.ne.s32.totalorder %s97, %s98
      %p107 = scmp.eq.s32.totalorder %s24, 0
      %p108 = por %p106, %p107
      %p109 = scmp.ne.s32.totalorder %s97, %s98
      %p110 = scmp.eq.s32.totalorder %s25, 1
      %p111 = por %p109, %p110
      %p113 = scmp.ne.s32.totalorder %s98, %s112
      %p114 = scmp.eq.s32.totalorder %s25, 0
      %p115 = por %p113, %p114
      %s117 = sadd.s32 %s116, 1
      %p120 = scmp.eq.s32.totalorder %s19, 1
      %p121 = scmp.ne.s32.totalorder %s116, %s118
      %p122 = scmp.eq.s32.totalorder %s19, 0
      %p123 = por %p121, %p122
      %p124 = scmp.ne.s32.totalorder %s116, %s118
      %p125 = scmp.eq.s32.totalorder %s24, 1
      %p126 = por %p124, %p125
      %p127 = scmp.ne.s32.totalorder %s118, %s119
      %p128 = scmp.eq.s32.totalorder %s24, 0
      %p129 = por %p127, %p128
      %p130 = scmp.ne.s32.totalorder %s118, %s119
      %p131 = scmp.eq.s32.totalorder %s25, 1
      %p132 = por %p130, %p131
      %p134 = scmp.ne.s32.totalorder %s119, %s133
      %p135 = scmp.eq.s32.totalorder %s25, 0
      %p136 = por %p134, %p135
      %s138 = sadd.s32 %s137, 1
      %p141 = scmp.eq.s32.totalorder %s19, 1
      %p142 = scmp.ne.s32.totalorder %s137, %s139
      %p143 = scmp.eq.s32.totalorder %s19, 0
      %p144 = por %p142, %p143
      %p145 = scmp.ne.s32.totalorder %s137, %s139
      %p146 = scmp.eq.s32.totalorder %s24, 1
      %p147 = por %p145, %p146
      %p148 = scmp.ne.s32.totalorder %s139, %s140
      %p149 = scmp.eq.s32.totalorder %s24, 0
      %p150 = por %p148, %p149
      %p151 = scmp.ne.s32.totalorder %s139, %s140
      %p152 = scmp.eq.s32.totalorder %s25, 1
      %p153 = por %p151, %p152
      %p155 = scmp.ne.s32.totalorder %s140, %s154
      %p156 = scmp.eq.s32.totalorder %s25, 0
      %p157 = por %p155, %p156
      %s159 = sadd.s32 %s158, 1
      %p162 = scmp.eq.s32.totalorder %s19, 1
      %p163 = scmp.ne.s32.totalorder %s158, %s160
      %p164 = scmp.eq.s32.totalorder %s19, 0
      %p165 = por %p163, %p164
      %p166 = scmp.ne.s32.totalorder %s158, %s160
      %p167 = scmp.eq.s32.totalorder %s24, 1
      %p168 = por %p166, %p167
      %p169 = scmp.ne.s32.totalorder %s160, %s161
      %p170 = scmp.eq.s32.totalorder %s24, 0
      %p171 = por %p169, %p170
      %p172 = scmp.ne.s32.totalorder %s160, %s161
      %p173 = scmp.eq.s32.totalorder %s25, 1
      %p174 = por %p172, %p173
      %p176 = scmp.ne.s32.totalorder %s161, %s175
      %p177 = scmp.eq.s32.totalorder %s25, 0
      %p178 = por %p176, %p177
      %s180 = sadd.s32 %s179, 1
      %p183 = scmp.eq.s32.totalorder %s19, 1
      %p184 = scmp.ne.s32.totalorder %s179, %s181
      %p185 = scmp.eq.s32.totalorder %s19, 0
      %p186 = por %p184, %p185
      %p187 = scmp.ne.s32.totalorder %s179, %s181
      %p188 = scmp.eq.s32.totalorder %s24, 1
      %p189 = por %p187, %p188
      %p190 = scmp.ne.s32.totalorder %s181, %s182
      %p191 = scmp.eq.s32.totalorder %s24, 0
      %p192 = por %p190, %p191
      %p193 = scmp.ne.s32.totalorder %s181, %s182
      %p194 = scmp.eq.s32.totalorder %s25, 1
      %p195 = por %p193, %p194
      %p197 = scmp.ne.s32.totalorder %s182, %s196
      %p198 = scmp.eq.s32.totalorder %s25, 0
      %p199 = por %p197, %p198
      %s201 = sadd.s32 %s200, 1
      %p204 = scmp.eq.s32.totalorder %s19, 1
      %p205 = scmp.ne.s32.totalorder %s200, %s202
      %p206 = scmp.eq.s32.totalorder %s19, 0
      %p207 = por %p205, %p206
      %p208 = scmp.ne.s32.totalorder %s200, %s202
      %p209 = scmp.eq.s32.totalorder %s24, 1
      %p210 = por %p208, %p209
      %p211 = scmp.ne.s32.totalorder %s202, %s203
      %p212 = scmp.eq.s32.totalorder %s24, 0
      %p213 = por %p211, %p212
      %p214 = scmp.ne.s32.totalorder %s202, %s203
      %p215 = scmp.eq.s32.totalorder %s25, 1
      %p216 = por %p214, %p215
      %p218 = scmp.ne.s32.totalorder %s203, %s217
      %p219 = scmp.eq.s32.totalorder %s25, 0
      %p220 = por %p218, %p219
      %s222 = sadd.s32 %s221, 1
      %p225 = scmp.eq.s32.totalorder %s19, 1
      %p226 = scmp.ne.s32.totalorder %s221, %s223
      %p227 = scmp.eq.s32.totalorder %s19, 0
      %p228 = por %p226, %p227
      %p229 = scmp.ne.s32.totalorder %s221, %s223
      %p230 = scmp.eq.s32.totalorder %s24, 1
      %p231 = por %p229, %p230
      %p232 = scmp.ne.s32.totalorder %s223, %s224
      %p233 = scmp.eq.s32.totalorder %s24, 0
      %p234 = por %p232, %p233
      %p235 = scmp.ne.s32.totalorder %s223, %s224
      %p236 = scmp.eq.s32.totalorder %s25, 1
      %p237 = por %p235, %p236
      %p239 = scmp.ne.s32.totalorder %s224, %s238
      %p240 = scmp.eq.s32.totalorder %s25, 0
      %p241 = por %p239, %p240
      %s242 = ssub.s32 %s19, %s26
      %p243 = scmp.eq.s32.totalorder %s242, 0
      %s245 = sadd.s32 %s244, 1
      %s246 = scalar_select %p243, %s244, %s245
      %p249 = pneg %p243
      %p250 = scmp.eq.s32.totalorder %s19, 1
      %p251 = por %p249, %p250
      %p252 = scmp.ne.s32.totalorder %s244, %s247
      %p253 = scmp.eq.s32.totalorder %s19, 0
      %p254 = por %p252, %p253
      %p255 = scmp.ne.s32.totalorder %s244, %s247
      %p256 = scmp.eq.s32.totalorder %s24, 1
      %p257 = por %p255, %p256
      %p258 = scmp.ne.s32.totalorder %s247, %s248
      %p259 = scmp.eq.s32.totalorder %s24, 0
      %p260 = por %p258, %p259
      %p261 = scmp.ne.s32.totalorder %s247, %s248
      %p262 = scmp.eq.s32.totalorder %s25, 1
      %p263 = por %p261, %p262
      %p265 = scmp.ne.s32.totalorder %s248, %s264
      %p266 = scmp.eq.s32.totalorder %s25, 0
      %p267 = por %p265, %p266
      %p268 = scmp.le.s32.totalorder 1, %s19
      %p269 = scmp.lt.s32.totalorder %s19, 3
      %p270 = pnand %p268, %p269
      %p271 = pneg %p270
      // Predicated region
      $region9: #{tpu_custom_call.1} parent=5 // pred_check
        _
      $region10: #{tpu_custom_call.1} parent=5 // pred_check_branch
        %273 = sbr.rel (%p270) target = $region12
      $region11: #{tpu_custom_call.1} parent=5 // pred_region
        %s274 = ssub.s32 %s19, 1
        // Predicated region
        $region13: #{tpu_custom_call.1} parent=11 // pred_check
          %p275 = pneg %p66
        $region14: #{tpu_custom_call.1} parent=11 // pred_check_branch
          %277 = sbr.rel (%p275) target = $region16
        $region15: #{tpu_custom_call.1} parent=11 // pred_region
          _
        $region16: #{tpu_custom_call.1} parent=11 // pred_fallthru
          _
        // Predicated region
        $region17: #{tpu_custom_call.1} parent=11 // pred_check
          %p278 = pneg %p87
        $region18: #{tpu_custom_call.1} parent=11 // pred_check_branch
          %280 = sbr.rel (%p278) target = $region20
        $region19: #{tpu_custom_call.1} parent=11 // pred_region
          _
        $region20: #{tpu_custom_call.1} parent=11 // pred_fallthru
          _
        // Predicated region
        $region21: #{tpu_custom_call.1} parent=11 // pred_check
          %p281 = pneg %p108
        $region22: #{tpu_custom_call.1} parent=11 // pred_check_branch
          %283 = sbr.rel (%p281) target = $region24
        $region23: #{tpu_custom_call.1} parent=11 // pred_region
          _
        $region24: #{tpu_custom_call.1} parent=11 // pred_fallthru
          _
        // Predicated region
        $region25: #{tpu_custom_call.1} parent=11 // pred_check
          %p284 = pneg %p129
        $region26: #{tpu_custom_call.1} parent=11 // pred_check_branch
          %286 = sbr.rel (%p284) target = $region28
        $region27: #{tpu_custom_call.1} parent=11 // pred_region
          _
        $region28: #{tpu_custom_call.1} parent=11 // pred_fallthru
          _
        // Predicated region
        $region29: #{tpu_custom_call.1} parent=11 // pred_check
          %p287 = pneg %p150
        $region30: #{tpu_custom_call.1} parent=11 // pred_check_branch
          %289 = sbr.rel (%p287) target = $region32
        $region31: #{tpu_custom_call.1} parent=11 // pred_region
          _
        $region32: #{tpu_custom_call.1} parent=11 // pred_fallthru
          _
        // Predicated region
        $region33: #{tpu_custom_call.1} parent=11 // pred_check
          %p290 = pneg %p171
        $region34: #{tpu_custom_call.1} parent=11 // pred_check_branch
          %292 = sbr.rel (%p290) target = $region36
        $region35: #{tpu_custom_call.1} parent=11 // pred_region
          _
        $region36: #{tpu_custom_call.1} parent=11 // pred_fallthru
          _
        // Predicated region
        $region37: #{tpu_custom_call.1} parent=11 // pred_check
          %p293 = pneg %p192
        $region38: #{tpu_custom_call.1} parent=11 // pred_check_branch
          %295 = sbr.rel (%p293) target = $region40
        $region39: #{tpu_custom_call.1} parent=11 // pred_region
          _
        $region40: #{tpu_custom_call.1} parent=11 // pred_fallthru
          _
        // Predicated region
        $region41: #{tpu_custom_call.1} parent=11 // pred_check
          %p296 = pneg %p213
        $region42: #{tpu_custom_call.1} parent=11 // pred_check_branch
          %298 = sbr.rel (%p296) target = $region44
        $region43: #{tpu_custom_call.1} parent=11 // pred_region
          _
        $region44: #{tpu_custom_call.1} parent=11 // pred_fallthru
          _
        // Predicated region
        $region45: #{tpu_custom_call.1} parent=11 // pred_check
          %p299 = pneg %p234
        $region46: #{tpu_custom_call.1} parent=11 // pred_check_branch
          %301 = sbr.rel (%p299) target = $region48
        $region47: #{tpu_custom_call.1} parent=11 // pred_region
          _
        $region48: #{tpu_custom_call.1} parent=11 // pred_fallthru
          _
      $region12: #{tpu_custom_call.1} parent=5 // pred_fallthru
        _
      %p302 = scmp.lt.s32.totalorder %s19, 2
      // Predicated region
      $region49: #{tpu_custom_call.1} parent=5 // pred_check
        %p303 = pneg %p302
      $region50: #{tpu_custom_call.1} parent=5 // pred_check_branch
        %305 = sbr.rel (%p303) target = $region52
      $region51: #{tpu_custom_call.1} parent=5 // pred_region
        // Predicated region
        $region53: #{tpu_custom_call.1} parent=51 // pred_check
          %p306 = pneg %p39
        $region54: #{tpu_custom_call.1} parent=51 // pred_check_branch
          %308 = sbr.rel (%p306) target = $region56
        $region55: #{tpu_custom_call.1} parent=51 // pred_region
          %p309 = scmp.lt.s32.totalorder %s19, 1
          %s310 = scalar_select %p309, %s19, 1
          %s311 = smul.addr %s310, 2
          %s312 = smul.addr %s311, 4
          %s313 = scalar_lea.vmem %s0, %s312
        $region56: #{tpu_custom_call.1} parent=51 // pred_fallthru
          _
      $region52: #{tpu_custom_call.1} parent=5 // pred_fallthru
        _
      %p314 = scmp.le.s32.totalorder 1, %s19
      %p315 = scmp.lt.s32.totalorder %s19, 3
      %p316 = pnand %p314, %p315
      %p317 = pneg %p316
      // Predicated region
      $region57: #{tpu_custom_call.1} parent=5 // pred_check
        _
      $region58: #{tpu_custom_call.1} parent=5 // pred_check_branch
        %319 = sbr.rel (%p316) target = $region60
      $region59: #{tpu_custom_call.1} parent=5 // pred_region
        %s320 = ssub.s32 %s19, 1
        %p321 = scmp.lt.s32.totalorder %s24, 1
        %s322 = scalar_select %p321, %s24, 1
        %s323 = smul.addr %s322, 2
        %s324 = smul.addr %s323, 4
        %s325 = scalar_lea.vmem %s0, %s324
        %p326 = pneg %p45
        %p327 = pneg %p42
        %p328 = pneg %p66
        %p329 = pneg %p63
        %p330 = pneg %p87
        %p331 = pneg %p84
        %p332 = pneg %p108
        %p333 = pneg %p105
        %p334 = pneg %p129
        %p335 = pneg %p126
        %p336 = pneg %p150
        %p337 = pneg %p147
        %p338 = pneg %p171
        %p339 = pneg %p168
        %p340 = pneg %p192
        %p341 = pneg %p189
        %p342 = pneg %p213
        %p343 = pneg %p210
        %p344 = pneg %p234
        %p345 = pneg %p231
        %p346 = pneg %p260
        %p347 = pneg %p257
        %s348 = sand.u32 %s247, 1
        %s349 = scalar_lea.sflag [#allocation3], %s348
        %s350 = sand.u32 %s247, 1
        %s351 = smul.addr %s350, 16
        %s352 = scalar_lea.vmem [#allocation2], %s351
        %p353 = scmp.lt.s32.totalorder %s24, 1
        %s354 = scalar_select %p353, %s24, 1
        %s355 = smul.addr %s354, 2
        %s356 = smul.addr %s355, 4
        %s357 = scalar_lea.vmem %s0, %s356
        %v359 = vld [vmem:[%s357] sm:$0xff]
        %v360 = vlaneseq
        %v361 = vand.u32 %v360, 127
        %v362 = vadd.s32 %v361, 128
        %v363 = vand.u32 %v361, 15
        %v364 = vand.u32 %v362, 15
        %v365 = vadd.s32 %v361, 4294967280
        %v366 = vadd.s32 %v362, 4294967280
        %vm367 = vcmp.ge.s32.totalorder %v365, 0
        %vm368 = vcmp.ge.s32.totalorder %v366, 0
        %vm369 = vcmp.lt.s32.totalorder %v365, 256
        %vm370 = vcmp.lt.s32.totalorder %v366, 256
        %vm371 = vmand %vm367, %vm369
        %vm372 = vmand %vm368, %vm370
        %v373 = vadd.s32 %v363, 4294967295
        %v374 = vadd.s32 %v364, 4294967295
        %vm375 = vcmp.ge.s32.totalorder %v373, 0
        %vm376 = vcmp.ge.s32.totalorder %v374, 0
        %vm377 = vcmp.lt.s32.totalorder %v373, 16
        %vm378 = vcmp.lt.s32.totalorder %v374, 16
        %vm379 = vmand %vm375, %vm377
        %vm380 = vmand %vm376, %vm378
        %vm381 = vmand %vm371, %vm379
        %vm382 = vmand %vm372, %vm380
        %vm383 = vcmp.ge.s32.totalorder %v363, 0
        %vm384 = vcmp.ge.s32.totalorder %v364, 0
        %vm385 = vcmp.lt.s32.totalorder %v363, 16
        %vm386 = vcmp.lt.s32.totalorder %v364, 16
        %vm387 = vmand %vm383, %vm385
        %vm388 = vmand %vm384, %vm386
        %vm389 = vmand %vm371, %vm387
        %vm390 = vmand %vm372, %vm388
        %v391 = vadd.s32 %v363, 1
        %v392 = vadd.s32 %v364, 1
        %vm393 = vcmp.ge.s32.totalorder %v391, 0
        %vm394 = vcmp.ge.s32.totalorder %v392, 0
        %vm395 = vcmp.lt.s32.totalorder %v391, 16
        %vm396 = vcmp.lt.s32.totalorder %v392, 16
        %vm397 = vmand %vm393, %vm395
        %vm398 = vmand %vm394, %vm396
        %vm399 = vmand %vm371, %vm397
        %vm400 = vmand %vm372, %vm398
        %vm401 = vcmp.ge.s32.totalorder %v361, 0
        %vm402 = vcmp.ge.s32.totalorder %v362, 0
        %vm403 = vcmp.lt.s32.totalorder %v361, 256
        %vm404 = vcmp.lt.s32.totalorder %v362, 256
        %vm405 = vmand %vm401, %vm403
        %vm406 = vmand %vm402, %vm404
        %vm407 = vmand %vm405, %vm379
        %vm408 = vmand %vm406, %vm380
        %vm409 = vmand %vm405, %vm387
        %vm410 = vmand %vm406, %vm388
        %vm411 = vmand %vm405, %vm397
        %vm412 = vmand %vm406, %vm398
        %v413 = vadd.s32 %v361, 16
        %v414 = vadd.s32 %v362, 16
        %vm415 = vcmp.ge.s32.totalorder %v413, 0
        %vm416 = vcmp.ge.s32.totalorder %v414, 0
        %vm417 = vcmp.lt.s32.totalorder %v413, 256
        %vm418 = vcmp.lt.s32.totalorder %v414, 256
        %vm419 = vmand %vm415, %vm417
        %vm420 = vmand %vm416, %vm418
        %vm421 = vmand %vm419, %vm379
        %vm422 = vmand %vm420, %vm380
        %vm423 = vmand %vm419, %vm387
        %vm424 = vmand %vm420, %vm388
        %vm425 = vmand %vm419, %vm397
        %vm426 = vmand %vm420, %vm398
        %v427 = vld [vmem:[%s1] sm:$0xf]
        %v429 = vcombine.high %v359, %v359
        %430 = vrot.lane.b32.xlu0 %v359, 17
        %v431 = vpop.permute.xlu0 %430
        %432 = vrot.lane.b32.xlu0 %v429, 17
        %v433 = vpop.permute.xlu0 %432
        %vm434 = vcmask 138240
        %v435 = vsel %vm434, %v431, %v433
        %v439 = vsel %vm434, 0.0, %v431
        %v440 = vsel %vm434, %v433, 0.0
        %v441 = vsel %vm381, 1, 0
        %v442 = vsel %vm382, 1, 0
        %vm443 = vcmp.eq.s32.totalorder %v441, 1
        %vm444 = vcmp.eq.s32.totalorder %v442, 1
        %v445 = vsel %vm443, %v439, 0.0
        %v446 = vsel %vm444, %v435, 0.0
        %v447 = vsel %vm389, 1, 0
        %v448 = vsel %vm390, 1, 0
        %vm449 = vcmp.eq.s32.totalorder %v447, 1
        %vm450 = vcmp.eq.s32.totalorder %v448, 1
        %453 = vrot.lane.b32.xlu0 %v439, 127
        %v454 = vpop.permute.xlu0 %453
        %455 = vrot.lane.b32.xlu0 %v435, 127
        %v456 = vpop.permute.xlu0 %455
        %457 = vrot.lane.b32.xlu0 %v440, 127
        %v458 = vpop.permute.xlu0 %457
        %vm459 = vcmask 1039360
        %v460 = vsel %vm459, %v454, %v456
        %v461 = vsel %vm459, %v456, %v458
        %v464 = vsel %vm449, %v460, 0.0
        %v465 = vsel %vm450, %v461, 0.0
        %v466 = vsel %vm399, 1, 0
        %v467 = vsel %vm400, 1, 0
        %vm468 = vcmp.eq.s32.totalorder %v466, 1
        %vm469 = vcmp.eq.s32.totalorder %v467, 1
        %470 = vrot.lane.b32.xlu0 %v439, 126
        %v471 = vpop.permute.xlu0 %470
        %472 = vrot.lane.b32.xlu0 %v435, 126
        %v473 = vpop.permute.xlu0 %472
        %474 = vrot.lane.b32.xlu0 %v440, 126
        %v475 = vpop.permute.xlu0 %474
        %vm476 = vcmask 1031168
        %v477 = vsel %vm476, %v471, %v473
        %v478 = vsel %vm476, %v473, %v475
        %v481 = vsel %vm468, %v477, 0.0
        %v482 = vsel %vm469, %v478, 0.0
        %v483 = vsel %vm407, 1, 0
        %v484 = vsel %vm408, 1, 0
        %vm485 = vcmp.eq.s32.totalorder %v483, 1
        %vm486 = vcmp.eq.s32.totalorder %v484, 1
        %487 = vrot.lane.b32.xlu0 %v439, 112
        %v488 = vpop.permute.xlu0 %487
        %489 = vrot.lane.b32.xlu0 %v435, 112
        %v490 = vpop.permute.xlu0 %489
        %491 = vrot.lane.b32.xlu0 %v440, 112
        %v492 = vpop.permute.xlu0 %491
        %vm493 = vcmask 916480
        %v494 = vsel %vm493, %v488, %v490
        %v495 = vsel %vm493, %v490, %v492
        %v498 = vsel %vm485, %v494, 0.0
        %v499 = vsel %vm486, %v495, 0.0
        %v500 = vsel %vm409, 1, 0
        %v501 = vsel %vm410, 1, 0
        %vm502 = vcmp.eq.s32.totalorder %v500, 1
        %vm503 = vcmp.eq.s32.totalorder %v501, 1
        %504 = vrot.lane.b32.xlu0 %v439, 111
        %v505 = vpop.permute.xlu0 %504
        %506 = vrot.lane.b32.xlu0 %v435, 111
        %v507 = vpop.permute.xlu0 %506
        %508 = vrot.lane.b32.xlu0 %v440, 111
        %v509 = vpop.permute.xlu0 %508
        %vm510 = vcmask 908288
        %v511 = vsel %vm510, %v505, %v507
        %v512 = vsel %vm510, %v507, %v509
        %v515 = vsel %vm502, %v511, 0.0
        %v516 = vsel %vm503, %v512, 0.0
        %v517 = vsel %vm411, 1, 0
        %v518 = vsel %vm412, 1, 0
        %vm519 = vcmp.eq.s32.totalorder %v517, 1
        %vm520 = vcmp.eq.s32.totalorder %v518, 1
        %521 = vrot.lane.b32.xlu0 %v439, 110
        %v522 = vpop.permute.xlu0 %521
        %523 = vrot.lane.b32.xlu0 %v435, 110
        %v524 = vpop.permute.xlu0 %523
        %525 = vrot.lane.b32.xlu0 %v440, 110
        %v526 = vpop.permute.xlu0 %525
        %vm527 = vcmask 900096
        %v528 = vsel %vm527, %v522, %v524
        %v529 = vsel %vm527, %v524, %v526
        %v532 = vsel %vm519, %v528, 0.0
        %v533 = vsel %vm520, %v529, 0.0
        %v534 = vsel %vm421, 1, 0
        %v535 = vsel %vm422, 1, 0
        %vm536 = vcmp.eq.s32.totalorder %v534, 1
        %vm537 = vcmp.eq.s32.totalorder %v535, 1
        %538 = vrot.lane.b32.xlu0 %v439, 96
        %v539 = vpop.permute.xlu0 %538
        %540 = vrot.lane.b32.xlu0 %v435, 96
        %v541 = vpop.permute.xlu0 %540
        %542 = vrot.lane.b32.xlu0 %v440, 96
        %v543 = vpop.permute.xlu0 %542
        %vm544 = vcmask 785408
        %v545 = vsel %vm544, %v539, %v541
        %v546 = vsel %vm544, %v541, %v543
        %v549 = vsel %vm536, %v545, 0.0
        %v550 = vsel %vm537, %v546, 0.0
        %v551 = vsel %vm423, 1, 0
        %v552 = vsel %vm424, 1, 0
        %vm553 = vcmp.eq.s32.totalorder %v551, 1
        %vm554 = vcmp.eq.s32.totalorder %v552, 1
        %555 = vrot.lane.b32.xlu0 %v439, 95
        %v556 = vpop.permute.xlu0 %555
        %557 = vrot.lane.b32.xlu0 %v435, 95
        %v558 = vpop.permute.xlu0 %557
        %559 = vrot.lane.b32.xlu0 %v440, 95
        %v560 = vpop.permute.xlu0 %559
        %vm561 = vcmask 777216
        %v562 = vsel %vm561, %v556, %v558
        %v563 = vsel %vm561, %v558, %v560
        %v566 = vsel %vm553, %v562, 0.0
        %v567 = vsel %vm554, %v563, 0.0
        %v568 = vsel %vm425, 1, 0
        %v569 = vsel %vm426, 1, 0
        %vm570 = vcmp.eq.s32.totalorder %v568, 1
        %vm571 = vcmp.eq.s32.totalorder %v569, 1
        %572 = vrot.lane.b32.xlu0 %v439, 94
        %v573 = vpop.permute.xlu0 %572
        %574 = vrot.lane.b32.xlu0 %v435, 94
        %v575 = vpop.permute.xlu0 %574
        %576 = vrot.lane.b32.xlu0 %v440, 94
        %v577 = vpop.permute.xlu0 %576
        %vm578 = vcmask 769024
        %v579 = vsel %vm578, %v573, %v575
        %v580 = vsel %vm578, %v575, %v577
        %v583 = vsel %vm570, %v579, 0.0
        %v584 = vsel %vm571, %v580, 0.0
        %v587 = vrot.slane %v464, 4
        %v588 = vrot.slane %v465, 4
        %v593 = vrot.slane %v498, 4
        %v594 = vrot.slane %v499, 4
        %v599 = vrot.slane %v532, 4
        %v600 = vrot.slane %v533, 4
        %v605 = vrot.slane %v566, 4
        %v606 = vrot.slane %v567, 4
        %vm609 = vcmask 1043456
        %v610 = vsel %vm609, %v445, %v587
        %v611 = vsel %vm609, %v446, %v588
        %v612 = vsel %vm609, %v481, %v593
        %v613 = vsel %vm609, %v482, %v594
        %v614 = vsel %vm609, %v515, %v599
        %v615 = vsel %vm609, %v516, %v600
        %v616 = vsel %vm609, %v549, %v605
        %v617 = vsel %vm609, %v550, %v606
        %v618 = vpack.c.bf16 %v612, %v610
        %v619 = vpack.c.bf16 %v613, %v611
        %v620 = vpack.c.bf16 %v616, %v614
        %v621 = vpack.c.bf16 %v617, %v615
        %v622 = vpack.c.bf16 %v583, %v583
        %v623 = vpack.c.bf16 %v584, %v584
        %vm624 = vcmask 293888
        %v626 = vsel %vm624, %v427, 0
        %vm628 = vcmask 1041408
        %v630 = vsel %vm628, %v622, 0
        %v633 = vsel %vm628, %v623, 0
        %635 = vmatprep.subr.bf16.mxu0 0
        %636 = vmatpush1.bf16.msra.mxu0 0
        %637 = vmatprep.subr.bf16.mxu0 0
        %638 = vmatpush1.bf16.msra.mxu0 0
        %639 = vmatprep.subr.bf16.mxu0 0
        %640 = vmatpush1.bf16.msra.mxu0 0
        %641 = vmatprep.subr.bf16.mxu0 0
        %642 = vmatpush1.bf16.msra.mxu0 0
        %643 = vmatprep.subr.bf16.mxu0 0
        %644 = vmatpush1.bf16.msra.mxu0 0
        %645 = vmatprep.subr.bf16.mxu0 %v633
        %646 = vmatpush1.bf16.msra.mxu0 %v630
        %647 = vmatprep.subr.bf16.mxu0 %v621
        %648 = vmatpush1.bf16.msra.mxu0 %v620
        %649 = vmatprep.subr.bf16.mxu0 %v619
        %650 = vmatpush1.bf16.msra.mxu0 %v618
        %651 = vmatprep.subr.bf16.mxu0 0
        %652 = vmatpush2.bf16.msra.mxu0 0
        %653 = vmatprep.subr.bf16.mxu0 0
        %654 = vmatpush2.bf16.msra.mxu0 0
        %655 = vmatprep.subr.bf16.mxu0 0
        %656 = vmatpush2.bf16.msra.mxu0 0
        %657 = vmatprep.subr.bf16.mxu0 0
        %658 = vmatpush2.bf16.msra.mxu0 0
        %659 = vmatprep.subr.bf16.mxu0 0
        %660 = vmatpush2.bf16.msra.mxu0 0
        %661 = vmatprep.subr.bf16.mxu0 0
        %662 = vmatpush2.bf16.msra.mxu0 0
        %663 = vmatprep.subr.bf16.mxu0 0
        %664 = vmatpush2.bf16.msra.mxu0 0
        %665 = vmatprep.subr.bf16.mxu0 0
        %666 = vmatpush2.bf16.msra.mxu0 0
        %667 = vmatprep.mubr.bf16.mxu0 0
        %668 = vmatmul.mubr.bf16.gmra.mxu0 %v626
        %v669 = vpop.f32.mrf.mxu0
        %v670 = vadd.f32 0.0, %v669
        %v671 = vpop.f32.mrf.mxu0
        %v672 = vadd.f32 0.0, %v671
        %v673 = vpop.f32.mrf.mxu0
        %v674 = vpop.f32.mrf.mxu0
        %675 = vdwg.mxu0
        %v676 = vld [vmem:[%s2] sm:$0xff]
        %678 = vset.pattern.permute.xlu0 0
        %679 = vperm.xlu0 %678, %v676
        %v680 = vpop.permute.xlu0 %679
        %v682 = vmul.f32 %v670, %v680
        %v683 = vmul.f32 %v672, %v680
        %v684 = vld [vmem:[%s3] sm:$0xff]
        %686 = vset.pattern.permute.xlu0 0
        %687 = vperm.xlu0 %686, %v684
        %v688 = vpop.permute.xlu0 %687
        %v690 = vadd.f32 %v682, %v688
        %v691 = vadd.f32 %v683, %v688
        %v692 = vmax.f32 %v690, 0.0
        %v693 = vmax.f32 %v691, 0.0
        %v694 = vld [vmem:[%s4] sm:$0xf]
        %697 = vrot.lane.b32.xlu0 %v692, 17
        %v698 = vpop.permute.xlu0 %697
        %699 = vrot.lane.b32.xlu0 %v693, 17
        %v700 = vpop.permute.xlu0 %699
        %v701 = vsel %vm434, %v698, %v700
        %v705 = vsel %vm434, 0.0, %v698
        %v706 = vsel %vm434, %v700, 0.0
        %v707 = vsel %vm443, %v705, 0.0
        %v708 = vsel %vm444, %v701, 0.0
        %711 = vrot.lane.b32.xlu0 %v705, 127
        %v712 = vpop.permute.xlu0 %711
        %713 = vrot.lane.b32.xlu0 %v701, 127
        %v714 = vpop.permute.xlu0 %713
        %715 = vrot.lane.b32.xlu0 %v706, 127
        %v716 = vpop.permute.xlu0 %715
        %v717 = vsel %vm459, %v712, %v714
        %v718 = vsel %vm459, %v714, %v716
        %v721 = vsel %vm449, %v717, 0.0
        %v722 = vsel %vm450, %v718, 0.0
        %723 = vrot.lane.b32.xlu0 %v705, 126
        %v724 = vpop.permute.xlu0 %723
        %725 = vrot.lane.b32.xlu0 %v701, 126
        %v726 = vpop.permute.xlu0 %725
        %727 = vrot.lane.b32.xlu0 %v706, 126
        %v728 = vpop.permute.xlu0 %727
        %v729 = vsel %vm476, %v724, %v726
        %v730 = vsel %vm476, %v726, %v728
        %v733 = vsel %vm468, %v729, 0.0
        %v734 = vsel %vm469, %v730, 0.0
        %735 = vrot.lane.b32.xlu0 %v705, 112
        %v736 = vpop.permute.xlu0 %735
        %737 = vrot.lane.b32.xlu0 %v701, 112
        %v738 = vpop.permute.xlu0 %737
        %739 = vrot.lane.b32.xlu0 %v706, 112
        %v740 = vpop.permute.xlu0 %739
        %v741 = vsel %vm493, %v736, %v738
        %v742 = vsel %vm493, %v738, %v740
        %v745 = vsel %vm485, %v741, 0.0
        %v746 = vsel %vm486, %v742, 0.0
        %747 = vrot.lane.b32.xlu0 %v705, 111
        %v748 = vpop.permute.xlu0 %747
        %749 = vrot.lane.b32.xlu0 %v701, 111
        %v750 = vpop.permute.xlu0 %749
        %751 = vrot.lane.b32.xlu0 %v706, 111
        %v752 = vpop.permute.xlu0 %751
        %v753 = vsel %vm510, %v748, %v750
        %v754 = vsel %vm510, %v750, %v752
        %v757 = vsel %vm502, %v753, 0.0
        %v758 = vsel %vm503, %v754, 0.0
        %759 = vrot.lane.b32.xlu0 %v705, 110
        %v760 = vpop.permute.xlu0 %759
        %761 = vrot.lane.b32.xlu0 %v701, 110
        %v762 = vpop.permute.xlu0 %761
        %763 = vrot.lane.b32.xlu0 %v706, 110
        %v764 = vpop.permute.xlu0 %763
        %v765 = vsel %vm527, %v760, %v762
        %v766 = vsel %vm527, %v762, %v764
        %v769 = vsel %vm519, %v765, 0.0
        %v770 = vsel %vm520, %v766, 0.0
        %771 = vrot.lane.b32.xlu0 %v705, 96
        %v772 = vpop.permute.xlu0 %771
        %773 = vrot.lane.b32.xlu0 %v701, 96
        %v774 = vpop.permute.xlu0 %773
        %775 = vrot.lane.b32.xlu0 %v706, 96
        %v776 = vpop.permute.xlu0 %775
        %v777 = vsel %vm544, %v772, %v774
        %v778 = vsel %vm544, %v774, %v776
        %v781 = vsel %vm536, %v777, 0.0
        %v782 = vsel %vm537, %v778, 0.0
        %783 = vrot.lane.b32.xlu0 %v705, 95
        %v784 = vpop.permute.xlu0 %783
        %785 = vrot.lane.b32.xlu0 %v701, 95
        %v786 = vpop.permute.xlu0 %785
        %787 = vrot.lane.b32.xlu0 %v706, 95
        %v788 = vpop.permute.xlu0 %787
        %v789 = vsel %vm561, %v784, %v786
        %v790 = vsel %vm561, %v786, %v788
        %v793 = vsel %vm553, %v789, 0.0
        %v794 = vsel %vm554, %v790, 0.0
        %795 = vrot.lane.b32.xlu0 %v705, 94
        %v796 = vpop.permute.xlu0 %795
        %797 = vrot.lane.b32.xlu0 %v701, 94
        %v798 = vpop.permute.xlu0 %797
        %799 = vrot.lane.b32.xlu0 %v706, 94
        %v800 = vpop.permute.xlu0 %799
        %v801 = vsel %vm578, %v796, %v798
        %v802 = vsel %vm578, %v798, %v800
        %v805 = vsel %vm570, %v801, 0.0
        %v806 = vsel %vm571, %v802, 0.0
        %v807 = vpack.c.bf16 %v721, %v707
        %v808 = vpack.c.bf16 %v722, %v708
        %v809 = vpack.c.bf16 %v745, %v733
        %v810 = vpack.c.bf16 %v746, %v734
        %v811 = vpack.c.bf16 %v769, %v757
        %v812 = vpack.c.bf16 %v770, %v758
        %v813 = vpack.c.bf16 %v793, %v781
        %v814 = vpack.c.bf16 %v794, %v782
        %v815 = vpack.c.bf16 %v805, %v805
        %v816 = vpack.c.bf16 %v806, %v806
        %vm817 = vcmask 588800
        %v819 = vsel %vm817, %v694, 0
        %v822 = vsel %vm609, %v815, 0
        %v825 = vsel %vm609, %v816, 0
        %827 = vmatprep.subr.bf16.mxu0 0
        %828 = vmatpush1.bf16.msra.mxu0 0
        %829 = vmatprep.subr.bf16.mxu0 0
        %830 = vmatpush1.bf16.msra.mxu0 0
        %831 = vmatprep.subr.bf16.mxu0 0
        %832 = vmatpush1.bf16.msra.mxu0 0
        %833 = vmatprep.subr.bf16.mxu0 %v825
        %834 = vmatpush1.bf16.msra.mxu0 %v822
        %835 = vmatprep.subr.bf16.mxu0 %v814
        %836 = vmatpush1.bf16.msra.mxu0 %v813
        %837 = vmatprep.subr.bf16.mxu0 %v812
        %838 = vmatpush1.bf16.msra.mxu0 %v811
        %839 = vmatprep.subr.bf16.mxu0 %v810
        %840 = vmatpush1.bf16.msra.mxu0 %v809
        %841 = vmatprep.subr.bf16.mxu0 %v808
        %842 = vmatpush1.bf16.msra.mxu0 %v807
        %843 = vmatprep.subr.bf16.mxu0 0
        %844 = vmatpush2.bf16.msra.mxu0 0
        %845 = vmatprep.subr.bf16.mxu0 0
        %846 = vmatpush2.bf16.msra.mxu0 0
        %847 = vmatprep.subr.bf16.mxu0 0
        %848 = vmatpush2.bf16.msra.mxu0 0
        %849 = vmatprep.subr.bf16.mxu0 0
        %850 = vmatpush2.bf16.msra.mxu0 0
        %851 = vmatprep.subr.bf16.mxu0 0
        %852 = vmatpush2.bf16.msra.mxu0 0
        %853 = vmatprep.subr.bf16.mxu0 0
        %854 = vmatpush2.bf16.msra.mxu0 0
        %855 = vmatprep.subr.bf16.mxu0 0
        %856 = vmatpush2.bf16.msra.mxu0 0
        %857 = vmatprep.subr.bf16.mxu0 0
        %858 = vmatpush2.bf16.msra.mxu0 0
        %859 = vmatprep.mubr.bf16.mxu0 0
        %860 = vmatmul.mubr.bf16.gmra.mxu0 %v819
        %v861 = vpop.f32.mrf.mxu0
        %v862 = vadd.f32 0.0, %v861
        %v863 = vpop.f32.mrf.mxu0
        %v864 = vadd.f32 0.0, %v863
        %v865 = vpop.f32.mrf.mxu0
        %v866 = vpop.f32.mrf.mxu0
        %867 = vdwg.mxu0
        %v868 = vld [vmem:[%s5] sm:$0xff]
        %870 = vset.pattern.permute.xlu0 0
        %871 = vperm.xlu0 %870, %v868
        %v872 = vpop.permute.xlu0 %871
        %v874 = vmul.f32 %v862, %v872
        %v875 = vmul.f32 %v864, %v872
        %v876 = vld [vmem:[%s6] sm:$0xff]
        %878 = vset.pattern.permute.xlu0 0
        %879 = vperm.xlu0 %878, %v876
        %v880 = vpop.permute.xlu0 %879
        %v882 = vadd.f32 %v874, %v880
        %v883 = vadd.f32 %v875, %v880
        %v884 = vld [vmem:[%s7] sm:$0xf]
        %v886 = vpack.c.bf16 %v359, %v359
        %v887 = vpack.c.bf16 %v429, %v429
        %vm888 = vcmask 31744
        %v890 = vsel %vm888, %v884, 0
        %v893 = vsel %vm628, %v886, 0
        %v896 = vsel %vm628, %v887, 0
        %898 = vmatprep.subr.bf16.mxu0 0
        %899 = vmatpush1.bf16.msra.mxu0 0
        %900 = vmatprep.subr.bf16.mxu0 0
        %901 = vmatpush1.bf16.msra.mxu0 0
        %902 = vmatprep.subr.bf16.mxu0 0
        %903 = vmatpush1.bf16.msra.mxu0 0
        %904 = vmatprep.subr.bf16.mxu0 0
        %905 = vmatpush1.bf16.msra.mxu0 0
        %906 = vmatprep.subr.bf16.mxu0 0
        %907 = vmatpush1.bf16.msra.mxu0 0
        %908 = vmatprep.subr.bf16.mxu0 0
        %909 = vmatpush1.bf16.msra.mxu0 0
        %910 = vmatprep.subr.bf16.mxu0 0
        %911 = vmatpush1.bf16.msra.mxu0 0
        %912 = vmatprep.subr.bf16.mxu0 %v896
        %913 = vmatpush1.bf16.msra.mxu0 %v893
        %914 = vmatprep.subr.bf16.mxu0 0
        %915 = vmatpush2.bf16.msra.mxu0 0
        %916 = vmatprep.subr.bf16.mxu0 0
        %917 = vmatpush2.bf16.msra.mxu0 0
        %918 = vmatprep.subr.bf16.mxu0 0
        %919 = vmatpush2.bf16.msra.mxu0 0
        %920 = vmatprep.subr.bf16.mxu0 0
        %921 = vmatpush2.bf16.msra.mxu0 0
        %922 = vmatprep.subr.bf16.mxu0 0
        %923 = vmatpush2.bf16.msra.mxu0 0
        %924 = vmatprep.subr.bf16.mxu0 0
        %925 = vmatpush2.bf16.msra.mxu0 0
        %926 = vmatprep.subr.bf16.mxu0 0
        %927 = vmatpush2.bf16.msra.mxu0 0
        %928 = vmatprep.subr.bf16.mxu0 0
        %929 = vmatpush2.bf16.msra.mxu0 0
        %930 = vmatprep.mubr.bf16.mxu0 0
        %931 = vmatmul.mubr.bf16.gmra.mxu0 %v890
        %v932 = vpop.f32.mrf.mxu0
        %v933 = vadd.f32 0.0, %v932
        %v934 = vpop.f32.mrf.mxu0
        %v935 = vadd.f32 0.0, %v934
        %v936 = vpop.f32.mrf.mxu0
        %v937 = vpop.f32.mrf.mxu0
        %938 = vdwg.mxu0
        %v939 = vld [vmem:[%s8] sm:$0xff]
        %941 = vset.pattern.permute.xlu0 0
        %942 = vperm.xlu0 %941, %v939
        %v943 = vpop.permute.xlu0 %942
        %v945 = vmul.f32 %v933, %v943
        %v946 = vmul.f32 %v935, %v943
        %v947 = vld [vmem:[%s9] sm:$0xff]
        %949 = vset.pattern.permute.xlu0 0
        %950 = vperm.xlu0 %949, %v947
        %v951 = vpop.permute.xlu0 %950
        %v953 = vadd.f32 %v945, %v951
        %v954 = vadd.f32 %v946, %v951
        %v955 = vadd.f32 %v882, %v953
        %v956 = vadd.f32 %v883, %v954
        %v957 = vmax.f32 %v955, 0.0
        %v958 = vmax.f32 %v956, 0.0
        %959 = vst [vmem:[%s352] sm:$0xff] %v957
        %960 = vst [vmem:[%s352 + $0x8] sm:$0xff] %v958
        %s961 = sand.u32 %s247, 1
        %s962 = scalar_lea.sflag [#allocation3], %s961
        %s963 = sand.u32 %s247, 1
        %s964 = smul.addr %s963, 16
        %s965 = scalar_lea.vmem [#allocation2], %s964
        // Predicated region
        $region61: #{tpu_custom_call.1} parent=59 // pred_check
          %p966 = pneg %p257
        $region62: #{tpu_custom_call.1} parent=59 // pred_check_branch
          %968 = sbr.rel (%p966) target = $region64
        $region63: #{tpu_custom_call.1} parent=59 // pred_region
          %s970 = ssub.s32 256, 256
          %971 = vsyncadd %s962, %s970
          %s972 = smul.addr %s24, 2
          %s973 = smul.addr %s972, 128
          %s974 = scalar_lea.hbm %s10, %s973
          %s976 = sshll.u32 %s965, 4
          %s977 = int_to_ptr.vmem [resolvable:$true] %s976
          %979 = dma.vmem_to_hbm [thread:$0]  %s977, 256, %s974, %s962
        $region64: #{tpu_custom_call.1} parent=59 // pred_fallthru
          _
      $region60: #{tpu_custom_call.1} parent=5 // pred_fallthru
        _
      %p980 = scmp.le.s32.totalorder 2, %s19
      // Predicated region
      $region65: #{tpu_custom_call.1} parent=5 // pred_check
        %p981 = pneg %p980
      $region66: #{tpu_custom_call.1} parent=5 // pred_check_branch
        %983 = sbr.rel (%p981) target = $region68
      $region67: #{tpu_custom_call.1} parent=5 // pred_region
        %s984 = ssub.s32 %s19, 2
        // Predicated region
        $region69: #{tpu_custom_call.1} parent=67 // pred_check
          %p985 = pneg %p263
        $region70: #{tpu_custom_call.1} parent=67 // pred_check_branch
          %987 = sbr.rel (%p985) target = $region72
        $region71: #{tpu_custom_call.1} parent=67 // pred_region
          %s988 = sand.u32 %s248, 1
          %s989 = scalar_lea.sflag [#allocation3], %s988
          %s990 = sand.u32 %s248, 1
          %s991 = smul.addr %s990, 16
          %s992 = scalar_lea.vmem [#allocation2], %s991
          %993 = dma.done %s989, 256
        $region72: #{tpu_custom_call.1} parent=67 // pred_fallthru
          _
      $region68: #{tpu_custom_call.1} parent=5 // pred_fallthru
        _
    $region6: #{tpu_custom_call.1} parent=1 // loop_footer
      %s23 = sadd.s32 1, %s19
    $region7: #{tpu_custom_call.1} parent=1 // loop_footer_branch
      %18 = sbr.rel target = $region3
    $region8: #{tpu_custom_call.1} parent=1 // loop_exit
      _
    %994 = vsyncpa [#allocation3], 1
    %s995 = scalar_lea.sflag [#allocation3], 1
    %996 = vsyncpa %s995, 1

</llo_original>
